<compile_context>
chip_gen: v7x
topology: tpu7x:2x2x1
jax: 0.10.0
libtpu: 0.0.40
codegen_flags: <defaults>
</compile_context>

<pallas_src>
import functools
import math

import jax
import jax.numpy as jnp
from jax import lax
from jax.experimental import pallas as pl
from jax.experimental.pallas import tpu as pltpu


# ---------------------------------------------------------------------------
# small helpers
# ---------------------------------------------------------------------------
def _round_up(x, m):
    return ((x + m - 1) // m) * m


def _pick_row_tile(h, w, bytes_per_row, target_bytes=4 << 20, max_th=None):
    """Largest divisor th of H such that the per-tile working set
    (~th*W*bytes_per_row) stays under target_bytes and th*W is a multiple of
    8 (sublane aligned)."""
    max_th = h if max_th is None else max(1, min(max_th, h))
    cands = [t for t in range(1, max_th + 1)
             if h % t == 0 and (t * w) % 8 == 0
             and t * w * bytes_per_row <= target_bytes]
    if cands:
        return max(cands)
    cands = [t for t in range(1, max_th + 1)
             if h % t == 0 and (t * w) % 8 == 0]
    if cands:
        return min(cands)
    # Fallback: full extent is always a legal block shape (see review note --
    # only legal BECAUSE the block then equals the full array extent).
    return h


# ---------------------------------------------------------------------------
# weight regrouping: ConvTranspose2d(k=4, s=2, p=1) == 3x3 "same" conv with
# 4 sub-pixel (dy, dx) output groups.
# ---------------------------------------------------------------------------
def _build_wtap(w):
    """w: (Cin, Cout, 4, 4) -> (3, 3, Cin, 4*Cout), columns = (dy, dx, cout).

    y[n, cout, 2h+dy, 2j+dx] =
        sum_{a,b,cin} xpad[n, h+a, j+b, cin] * wtap[a, b, cin, (dy,dx,cout)]
    with nonzero taps only at a in {dy, dy+1}, b in {dx, dx+1}.
    """
    cin, cout = w.shape[0], w.shape[1]
    wt = jnp.zeros((3, 3, cin, 2, 2, cout), dtype=w.dtype)
    for dy in range(2):
        for dx in range(2):
            for a in range(dy, dy + 2):
                for b in range(dx, dx + 2):
                    kh = 3 + dy - 2 * a
                    kw = 3 + dx - 2 * b
                    wt = wt.at[a, b, :, dy, dx, :].set(w[:, :, kh, kw])
    return wt.reshape(3, 3, cin, 4 * cout)


# ---------------------------------------------------------------------------
# Pass 1 kernel: implicit-GEMM transposed conv (single fused K=9*Cin matmul)
# with fused BatchNorm partial statistics.
# ---------------------------------------------------------------------------
def _deconv_stats_kernel(th, wd, x_ref, w_ref, y_ref, stat_ref, patch_ref):
    """x_ref     : (H+2, W+2, Cin)   zero-padded NHWC input image (bf16)
       w_ref     : (9*Cin, c4p)      regrouped deconv taps, N padded  (bf16)
       y_ref     : (th*W, c4p)       raw conv tile (f32), rows=(h,j),
                                     cols=(dy,dx,c) + zero lane padding
       stat_ref  : (2, c4p)          [col sums ; col sums of squares]
       patch_ref : (th*W, 9*Cin)     VMEM im2col scratch (bf16)
    """
    cin = x_ref.shape[-1]
    h0 = pl.program_id(1) * th

    # Build the (th*W, 9*Cin) im2col operand ONCE per tile, entirely in VMEM.
    # One halo stripe read per tap row `a`; the three `b` column shifts are
    # static sublane slices whose reshape to (th*W, Cin) is layout-preserving
    # when W is a multiple of 8.
    for a in range(3):
        stripe = x_ref[pl.ds(h0 + a, th), :, :]               # (th, W+2, Cin)
        for b in range(3):
            k0 = (a * 3 + b) * cin
            patch_ref[:, k0:k0 + cin] = (
                stripe[:, b:b + wd, :].reshape(th * wd, cin))

    # Single K=9*Cin MXU matmul, f32 accumulation, lane-dense (c4p) output.
    acc = jnp.dot(patch_ref[...], w_ref[...],
                  preferred_element_type=jnp.float32)          # (th*W, c4p)
    y_ref[...] = acc

    # Fused BatchNorm partial statistics, packed into one (2, c4p) block
    # (two sub-stores instead of an in-kernel concatenate).
    stat_ref[0:1, :] = jnp.sum(acc, axis=0, keepdims=True)
    stat_ref[1:2, :] = jnp.sum(acc * acc, axis=0, keepdims=True)


# ---------------------------------------------------------------------------
# Forward wrapper
# ---------------------------------------------------------------------------
def conv_transpose_block_forward(x, skip, w, b, gamma, beta, eps=1e-5,
                                 mxu_dtype=jnp.bfloat16, out_dtype=None):
    """x: (N, Cin, H, W) NCHW; skip: (N, Cs, 2H, 2W) NCHW; w: (Cin, Cout, 4, 4).

    out_dtype=None keeps the module's float32 output; pass jnp.bfloat16 to
    halve the final HBM write if the consumer tolerates bf16 activations.
    """
    n, cin, h, wd = x.shape
    cout = w.shape[1]
    cs = skip.shape[1]
    c4 = 4 * cout
    c4p = _round_up(c4, 128)                       # lane-dense matmul N dim
    k9 = 9 * cin
    hw = h * wd
    assert skip.shape == (n, cs, 2 * h, 2 * wd), skip.shape
    out_dtype = jnp.float32 if out_dtype is None else out_dtype

    # ---- tiny XLA prep (layout-only on the small input / weights) ----------
    x_pad = jnp.pad(jnp.transpose(x, (0, 2, 3, 1)),
                    ((0, 0), (1, 1), (1, 1), (0, 0))).astype(mxu_dtype)
    wtap = _build_wtap(w.astype(jnp.float32)).reshape(k9, c4)
    wtap = jnp.pad(wtap, ((0, 0), (0, c4p - c4))).astype(mxu_dtype)
    del b  # conv bias cancels exactly under training-mode BatchNorm.
    # (Note: PyTorch running_mean/var buffers would include the bias; the
    #  normalized training-mode output does not -- semantics preserved.)

    # ---- tile sizing: biggest tile under ~4 MiB, >= 2 grid steps total -----
    bytes_per_row = (2 * c4p * 4                      # y tile, double-buffered
                     + _round_up(k9, 128) * 2         # im2col scratch (bf16)
                     + 2 * _round_up(cin, 128) * 2)   # stripe reads (bf16)
    th = _pick_row_tile(h, wd, bytes_per_row, target_bytes=4 << 20,
                        max_th=(h if n >= 2 else max(1, h // 2)))
    ht = h // th

    # ---- explicit VMEM budget (review: set vmem_limit_bytes) ---------------
    est = (2 * (h + 2) * _round_up(wd + 2, 16) * max(cin, 128) * 2   # x_pad
           + 2 * _round_up(k9, 16) * c4p * 2                          # wtap
           + 2 * th * wd * c4p * 4                                    # y tiles
           + 2 * 8 * c4p * 4                                          # stats
           + th * wd * _round_up(k9, 128) * 2)                        # scratch
    vmem_limit = int(min(112 << 20, max(32 << 20, 2 * est)))

    # ---- Pass 1: fused-K implicit-GEMM deconv + packed BN partial stats ----
    y_raw, stats = pl.pallas_call(
        functools.partial(_deconv_stats_kernel, th, wd),
        out_shape=(
            jax.ShapeDtypeStruct((n, hw, c4p), jnp.float32),
            jax.ShapeDtypeStruct((n, ht, 2, c4p), jnp.float32),
        ),
        grid_spec=pltpu.PrefetchScalarGridSpec(
            num_scalar_prefetch=0,
            grid=(n, ht),
            in_specs=[
                pl.BlockSpec((None, h + 2, wd + 2, cin),
                             lambda i, t: (i, 0, 0, 0)),
                pl.BlockSpec((k9, c4p), lambda i, t: (0, 0)),
            ],
            out_specs=(
                pl.BlockSpec((None, th * wd, c4p), lambda i, t: (i, t, 0)),
                pl.BlockSpec((None, None, 2, c4p), lambda i, t: (i, t, 0, 0)),
            ),
            scratch_shapes=[pltpu.VMEM((th * wd, k9), mxu_dtype)],
        ),
        compiler_params=pltpu.CompilerParams(
            dimension_semantics=("parallel", "parallel"),
            vmem_limit_bytes=vmem_limit),
    )(x_pad, wtap)

    # ---- BatchNorm batch statistics (training mode, biased variance) -------
    cnt = jnp.float32(n * 4 * hw)                  # = N * 2H * 2W
    ch_sum = jnp.sum(stats[:, :, 0, :c4], axis=(0, 1)).reshape(4, cout).sum(0)
    ch_sq = jnp.sum(stats[:, :, 1, :c4], axis=(0, 1)).reshape(4, cout).sum(0)
    mean = ch_sum / cnt
    # single-pass E[x^2] - E[x]^2 in f32 (adequate for these magnitudes;
    # a shifted / two-pass accumulation would be safer for trained weights)
    var = jnp.maximum(ch_sq / cnt - mean * mean, 0.0)
    scale = gamma.astype(jnp.float32) * lax.rsqrt(var + eps)
    shift = beta.astype(jnp.float32) - mean * scale

    # ---- XLA-fused epilogue: sub-pixel deinterleave + BN + ReLU + concat ----
    # One read of y_raw and skip, one write of out; scale*y+shift and ReLU are
    # fused by XLA into the relayout copy (review option (a): no pass 2).
    y = y_raw[:, :, :c4].reshape(n, h, wd, 2, 2, cout)         # (n,h,j,dy,dx,c)
    y = jnp.transpose(y, (0, 5, 1, 3, 2, 4)).reshape(n, cout, 2 * h, 2 * wd)
    yn = jnp.maximum(y * scale[None, :, None, None]
                     + shift[None, :, None, None], 0.0)
    out = jnp.concatenate([yn.astype(out_dtype), skip.astype(out_dtype)],
                          axis=1)
    return out


# ---------------------------------------------------------------------------
# Pure-XLA reference (correctness check only)
# ---------------------------------------------------------------------------
def reference_forward(x, skip, w, b, gamma, beta, eps=1e-5,
                      conv_input_dtype=jnp.float32):
    """conv_input_dtype=bfloat16 reproduces the kernel's deliberate bf16
    rounding of the MXU operands (accumulation stays f32)."""
    xr = x.astype(conv_input_dtype).astype(jnp.float32)
    wr = w.astype(conv_input_dtype).astype(jnp.float32)
    rhs = jnp.transpose(wr[:, :, ::-1, ::-1], (1, 0, 2, 3))   # (Cout, Cin, 4, 4)
    y = lax.conv_general_dilated(
        xr, rhs, window_strides=(1, 1), padding=[(2, 2), (2, 2)],
        lhs_dilation=(2, 2), dimension_numbers=("NCHW", "OIHW", "NCHW"),
        precision=lax.Precision.HIGHEST)
    y = y + b[None, :, None, None]
    mean = jnp.mean(y, axis=(0, 2, 3), keepdims=True)
    var = jnp.mean((y - mean) ** 2, axis=(0, 2, 3), keepdims=True)
    yn = (y - mean) / jnp.sqrt(var + eps)
    yn = yn * gamma[None, :, None, None] + beta[None, :, None, None]
    yn = jnp.maximum(yn, 0.0)
    return jnp.concatenate([yn, skip], axis=1)


if __name__ == "__main__":
    key = jax.random.PRNGKey(0)
    N, Cin, H, Wd = 2, 4, 16, 16
    Cout = 8
    Cs = Cout                                   # U-Net-style skip channels

    k1, k2, k3, k4 = jax.random.split(key, 4)
    x = jax.random.normal(k1, (N, Cin, H, Wd), dtype=jnp.float32)
    skip = jax.random.normal(k2, (N, Cs, 2 * H, 2 * Wd), dtype=jnp.float32)

    # ConvTranspose2d weight (Cin, Cout, 4, 4): xavier_uniform (PyTorch fans).
    fan_in, fan_out = Cout * 16, Cin * 16
    wbound = math.sqrt(6.0 / (fan_in + fan_out))
    W = jax.random.uniform(k3, (Cin, Cout, 4, 4), minval=-wbound, maxval=wbound,
                           dtype=jnp.float32)
    bbound = 1.0 / math.sqrt(fan_in)
    bias = jax.random.uniform(k4, (Cout,), minval=-bbound, maxval=bbound,
                              dtype=jnp.float32)
    gamma = jnp.ones((Cout,), jnp.float32)      # BatchNorm2d default affine
    beta = jnp.zeros((Cout,), jnp.float32)

    out = jax.jit(conv_transpose_block_forward)(x, skip, W, bias, gamma, beta)
    out = jax.block_until_ready(out)
    assert out.shape == (N, Cout + Cs, 2 * H, 2 * Wd), out.shape

    # Tight check: reference with the same bf16 rounding of the MXU operands
    # (everything else is f32) -> isolates kernel/layout/BN correctness.
    ref_bf16 = reference_forward(x, skip, W, bias, gamma, beta,
                                 conv_input_dtype=jnp.bfloat16)
    err_tight = float(jnp.max(jnp.abs(out - ref_bf16)))
    assert jnp.allclose(out, ref_bf16, atol=1e-3, rtol=1e-3), err_tight

    # Loose check: exact f32 module semantics (difference only from the
    # deliberate bf16 rounding of conv inputs on the MXU).
    ref_f32 = reference_forward(x, skip, W, bias, gamma, beta)
    err_loose = float(jnp.max(jnp.abs(out - ref_f32)))
    assert jnp.allclose(out, ref_f32, atol=6e-2, rtol=6e-2), err_loose

    print("KERNEL_OK")
</pallas_src>

<mosaic_0001>
module attributes {stable_mosaic.version = 11 : i64} {
  func.func @_deconv_stats_kernel(%arg0: i32, %arg1: i32, %arg2: memref<1x18x18x4xbf16, #tpu.memory_space<vmem>>, %arg3: memref<36x128xbf16, #tpu.memory_space<vmem>>, %arg4: memref<1x256x128xf32, #tpu.memory_space<vmem>>, %arg5: memref<1x1x2x128xf32, #tpu.memory_space<vmem>>, %arg6: memref<256x36xbf16, #tpu.memory_space<vmem>>) attributes {dimension_semantics = [#tpu.dimension_semantics<parallel>, #tpu.dimension_semantics<parallel>], iteration_bounds = array<i64: 2, 1>, scalar_prefetch = 0 : i64, scratch_operands = 1 : i64, tpu.core_type = #tpu.core_type<tc>, window_params = [{transform_indices = @transform_0, window_bounds = array<i64: 1, 18, 18, 4>}, {pipeline_mode = #tpu.pipeline_mode<synchronous>, transform_indices = @transform_1, window_bounds = array<i64: 36, 128>}, {transform_indices = @transform_2, window_bounds = array<i64: 1, 256, 128>}, {transform_indices = @transform_3, window_bounds = array<i64: 1, 1, 2, 128>}]} {
    %c16_i32 = arith.constant 16 : i32
    %0 = arith.muli %arg1, %c16_i32 : i32
    %c0_i32 = arith.constant 0 : i32
    %1 = arith.addi %0, %c0_i32 : i32
    %c0 = arith.constant 0 : index
    %2 = arith.index_cast %1 : i32 to index
    %c0_0 = arith.constant 0 : index
    %c0_1 = arith.constant 0 : index
    %3 = vector.load %arg2[%c0, %2, %c0_0, %c0_1] : memref<1x18x18x4xbf16, #tpu.memory_space<vmem>>, vector<1x16x18x4xbf16>
    %4 = vector.shape_cast %3 : vector<1x16x18x4xbf16> to vector<16x18x4xbf16>
    %5 = vector.extract_strided_slice %4 {offsets = [0, 0, 0], sizes = [16, 16, 4], strides = [1, 1, 1]} : vector<16x18x4xbf16> to vector<16x16x4xbf16>
    %6 = vector.shape_cast %5 : vector<16x16x4xbf16> to vector<256x4xbf16>
    %c0_2 = arith.constant 0 : index
    %c0_3 = arith.constant 0 : index
    %7 = vector.load %arg6[%c0_2, %c0_3] : memref<256x36xbf16, #tpu.memory_space<vmem>>, vector<256x4xbf16>
    tpu.vector_store %arg6[%c0_2, %c0_3], %6 {strides = array<i32>} : memref<256x36xbf16, #tpu.memory_space<vmem>>, vector<256x4xbf16>,
    %8 = vector.extract_strided_slice %4 {offsets = [0, 1, 0], sizes = [16, 16, 4], strides = [1, 1, 1]} : vector<16x18x4xbf16> to vector<16x16x4xbf16>
    %9 = vector.shape_cast %8 : vector<16x16x4xbf16> to vector<256x4xbf16>
    %c0_4 = arith.constant 0 : index
    %c4 = arith.constant 4 : index
    %10 = vector.load %arg6[%c0_4, %c4] : memref<256x36xbf16, #tpu.memory_space<vmem>>, vector<256x4xbf16>
    tpu.vector_store %arg6[%c0_4, %c4], %9 {strides = array<i32>} : memref<256x36xbf16, #tpu.memory_space<vmem>>, vector<256x4xbf16>,
    %11 = vector.extract_strided_slice %4 {offsets = [0, 2, 0], sizes = [16, 16, 4], strides = [1, 1, 1]} : vector<16x18x4xbf16> to vector<16x16x4xbf16>
    %12 = vector.shape_cast %11 : vector<16x16x4xbf16> to vector<256x4xbf16>
    %c0_5 = arith.constant 0 : index
    %c8 = arith.constant 8 : index
    %13 = vector.load %arg6[%c0_5, %c8] : memref<256x36xbf16, #tpu.memory_space<vmem>>, vector<256x4xbf16>
    tpu.vector_store %arg6[%c0_5, %c8], %12 {strides = array<i32>} : memref<256x36xbf16, #tpu.memory_space<vmem>>, vector<256x4xbf16>,
    %c1_i32 = arith.constant 1 : i32
    %14 = arith.addi %0, %c1_i32 : i32
    %c0_6 = arith.constant 0 : index
    %15 = arith.index_cast %14 : i32 to index
    %c0_7 = arith.constant 0 : index
    %c0_8 = arith.constant 0 : index
    %16 = vector.load %arg2[%c0_6, %15, %c0_7, %c0_8] : memref<1x18x18x4xbf16, #tpu.memory_space<vmem>>, vector<1x16x18x4xbf16>
    %17 = vector.shape_cast %16 : vector<1x16x18x4xbf16> to vector<16x18x4xbf16>
    %18 = vector.extract_strided_slice %17 {offsets = [0, 0, 0], sizes = [16, 16, 4], strides = [1, 1, 1]} : vector<16x18x4xbf16> to vector<16x16x4xbf16>
    %19 = vector.shape_cast %18 : vector<16x16x4xbf16> to vector<256x4xbf16>
    %c0_9 = arith.constant 0 : index
    %c12 = arith.constant 12 : index
    %20 = vector.load %arg6[%c0_9, %c12] : memref<256x36xbf16, #tpu.memory_space<vmem>>, vector<256x4xbf16>
    tpu.vector_store %arg6[%c0_9, %c12], %19 {strides = array<i32>} : memref<256x36xbf16, #tpu.memory_space<vmem>>, vector<256x4xbf16>,
    %21 = vector.extract_strided_slice %17 {offsets = [0, 1, 0], sizes = [16, 16, 4], strides = [1, 1, 1]} : vector<16x18x4xbf16> to vector<16x16x4xbf16>
    %22 = vector.shape_cast %21 : vector<16x16x4xbf16> to vector<256x4xbf16>
    %c0_10 = arith.constant 0 : index
    %c16 = arith.constant 16 : index
    %23 = vector.load %arg6[%c0_10, %c16] : memref<256x36xbf16, #tpu.memory_space<vmem>>, vector<256x4xbf16>
    tpu.vector_store %arg6[%c0_10, %c16], %22 {strides = array<i32>} : memref<256x36xbf16, #tpu.memory_space<vmem>>, vector<256x4xbf16>,
    %24 = vector.extract_strided_slice %17 {offsets = [0, 2, 0], sizes = [16, 16, 4], strides = [1, 1, 1]} : vector<16x18x4xbf16> to vector<16x16x4xbf16>
    %25 = vector.shape_cast %24 : vector<16x16x4xbf16> to vector<256x4xbf16>
    %c0_11 = arith.constant 0 : index
    %c20 = arith.constant 20 : index
    %26 = vector.load %arg6[%c0_11, %c20] : memref<256x36xbf16, #tpu.memory_space<vmem>>, vector<256x4xbf16>
    tpu.vector_store %arg6[%c0_11, %c20], %25 {strides = array<i32>} : memref<256x36xbf16, #tpu.memory_space<vmem>>, vector<256x4xbf16>,
    %c2_i32 = arith.constant 2 : i32
    %27 = arith.addi %0, %c2_i32 : i32
    %c0_12 = arith.constant 0 : index
    %28 = arith.index_cast %27 : i32 to index
    %c0_13 = arith.constant 0 : index
    %c0_14 = arith.constant 0 : index
    %29 = vector.load %arg2[%c0_12, %28, %c0_13, %c0_14] : memref<1x18x18x4xbf16, #tpu.memory_space<vmem>>, vector<1x16x18x4xbf16>
    %30 = vector.shape_cast %29 : vector<1x16x18x4xbf16> to vector<16x18x4xbf16>
    %31 = vector.extract_strided_slice %30 {offsets = [0, 0, 0], sizes = [16, 16, 4], strides = [1, 1, 1]} : vector<16x18x4xbf16> to vector<16x16x4xbf16>
    %32 = vector.shape_cast %31 : vector<16x16x4xbf16> to vector<256x4xbf16>
    %c0_15 = arith.constant 0 : index
    %c24 = arith.constant 24 : index
    %33 = vector.load %arg6[%c0_15, %c24] : memref<256x36xbf16, #tpu.memory_space<vmem>>, vector<256x4xbf16>
    tpu.vector_store %arg6[%c0_15, %c24], %32 {strides = array<i32>} : memref<256x36xbf16, #tpu.memory_space<vmem>>, vector<256x4xbf16>,
    %34 = vector.extract_strided_slice %30 {offsets = [0, 1, 0], sizes = [16, 16, 4], strides = [1, 1, 1]} : vector<16x18x4xbf16> to vector<16x16x4xbf16>
    %35 = vector.shape_cast %34 : vector<16x16x4xbf16> to vector<256x4xbf16>
    %c0_16 = arith.constant 0 : index
    %c28 = arith.constant 28 : index
    %36 = vector.load %arg6[%c0_16, %c28] : memref<256x36xbf16, #tpu.memory_space<vmem>>, vector<256x4xbf16>
    tpu.vector_store %arg6[%c0_16, %c28], %35 {strides = array<i32>} : memref<256x36xbf16, #tpu.memory_space<vmem>>, vector<256x4xbf16>,
    %37 = vector.extract_strided_slice %30 {offsets = [0, 2, 0], sizes = [16, 16, 4], strides = [1, 1, 1]} : vector<16x18x4xbf16> to vector<16x16x4xbf16>
    %38 = vector.shape_cast %37 : vector<16x16x4xbf16> to vector<256x4xbf16>
    %c0_17 = arith.constant 0 : index
    %c32 = arith.constant 32 : index
    %39 = vector.load %arg6[%c0_17, %c32] : memref<256x36xbf16, #tpu.memory_space<vmem>>, vector<256x4xbf16>
    tpu.vector_store %arg6[%c0_17, %c32], %38 {strides = array<i32>} : memref<256x36xbf16, #tpu.memory_space<vmem>>, vector<256x4xbf16>,
    %c0_18 = arith.constant 0 : index
    %c0_19 = arith.constant 0 : index
    %40 = vector.load %arg6[%c0_18, %c0_19] : memref<256x36xbf16, #tpu.memory_space<vmem>>, vector<256x36xbf16>
    %c0_20 = arith.constant 0 : index
    %c0_21 = arith.constant 0 : index
    %41 = vector.load %arg3[%c0_20, %c0_21] : memref<36x128xbf16, #tpu.memory_space<vmem>>, vector<36x128xbf16>
    %cst = arith.constant dense<0.000000e+00> : vector<256x128xf32>
    %42 = tpu.matmul %40, %41, %cst {dimension_numbers = #tpu.dot_dimension_numbers<[1], [0], [0], [1], [0, 0, 1, 1], [], []>} : vector<256x36xbf16>, vector<36x128xbf16>, vector<256x128xf32> -> vector<256x128xf32>
    %c0_22 = arith.constant 0 : index
    %c0_23 = arith.constant 0 : index
    %c0_24 = arith.constant 0 : index
    %43 = vector.load %arg4[%c0_22, %c0_23, %c0_24] : memref<1x256x128xf32, #tpu.memory_space<vmem>>, vector<1x256x128xf32>
    %44 = vector.shape_cast %43 : vector<1x256x128xf32> to vector<256x128xf32>
    %45 = vector.shape_cast %42 : vector<256x128xf32> to vector<1x256x128xf32>
    tpu.vector_store %arg4[%c0_22, %c0_23, %c0_24], %45 {strides = array<i32>} : memref<1x256x128xf32, #tpu.memory_space<vmem>>, vector<1x256x128xf32>,
    %cst_25 = arith.constant dense<0.000000e+00> : vector<128xf32>
    %46 = vector.multi_reduction <add>, %42, %cst_25 [0] : vector<256x128xf32> to vector<128xf32>
    %47 = vector.shape_cast %46 : vector<128xf32> to vector<1x128xf32>
    %c0_26 = arith.constant 0 : index
    %c0_27 = arith.constant 0 : index
    %c0_28 = arith.constant 0 : index
    %c0_29 = arith.constant 0 : index
    %48 = vector.load %arg5[%c0_26, %c0_27, %c0_28, %c0_29] : memref<1x1x2x128xf32, #tpu.memory_space<vmem>>, vector<1x1x1x128xf32>
    %49 = vector.shape_cast %48 : vector<1x1x1x128xf32> to vector<1x128xf32>
    %50 = vector.shape_cast %47 : vector<1x128xf32> to vector<1x1x1x128xf32>
    tpu.vector_store %arg5[%c0_26, %c0_27, %c0_28, %c0_29], %50 {strides = array<i32>} : memref<1x1x2x128xf32, #tpu.memory_space<vmem>>, vector<1x1x1x128xf32>,
    %51 = arith.mulf %42, %42 : vector<256x128xf32>
    %cst_30 = arith.constant dense<0.000000e+00> : vector<128xf32>
    %52 = vector.multi_reduction <add>, %51, %cst_30 [0] : vector<256x128xf32> to vector<128xf32>
    %53 = vector.shape_cast %52 : vector<128xf32> to vector<1x128xf32>
    %c0_31 = arith.constant 0 : index
    %c0_32 = arith.constant 0 : index
    %c1 = arith.constant 1 : index
    %c0_33 = arith.constant 0 : index
    %54 = vector.load %arg5[%c0_31, %c0_32, %c1, %c0_33] : memref<1x1x2x128xf32, #tpu.memory_space<vmem>>, vector<1x1x1x128xf32>
    %55 = vector.shape_cast %54 : vector<1x1x1x128xf32> to vector<1x128xf32>
    %56 = vector.shape_cast %53 : vector<1x128xf32> to vector<1x1x1x128xf32>
    tpu.vector_store %arg5[%c0_31, %c0_32, %c1, %c0_33], %56 {strides = array<i32>} : memref<1x1x2x128xf32, #tpu.memory_space<vmem>>, vector<1x1x1x128xf32>,
    return
  }
  func.func @transform_0(%arg0: i32, %arg1: i32) -> (i32, i32, i32, i32) {
    %c0_i32 = arith.constant 0 : i32
    %c0_i32_0 = arith.constant 0 : i32
    %c0_i32_1 = arith.constant 0 : i32
    %c0_i32_2 = arith.constant 0 : i32
    return %arg0, %c0_i32, %c0_i32_0, %c0_i32_1 : i32, i32, i32, i32
  }
  func.func @transform_1(%arg0: i32, %arg1: i32) -> (i32, i32) {
    %c0_i32 = arith.constant 0 : i32
    %c0_i32_0 = arith.constant 0 : i32
    %c0_i32_1 = arith.constant 0 : i32
    return %c0_i32, %c0_i32_0 : i32, i32
  }
  func.func @transform_2(%arg0: i32, %arg1: i32) -> (i32, i32, i32) {
    %c0_i32 = arith.constant 0 : i32
    %c0_i32_0 = arith.constant 0 : i32
    return %arg0, %arg1, %c0_i32 : i32, i32, i32
  }
  func.func @transform_3(%arg0: i32, %arg1: i32) -> (i32, i32, i32, i32) {
    %c0_i32 = arith.constant 0 : i32
    %c0_i32_0 = arith.constant 0 : i32
    %c0_i32_1 = arith.constant 0 : i32
    return %arg0, %arg1, %c0_i32, %c0_i32_0 : i32, i32, i32, i32
  }
}

</mosaic_0001>

<llo_original>
// kernel: conv_transpose_block_forward.1
$region0: #{conv_transpose_block_forward.1}
  #allocation0 [shape = 'u32[]', space=smem, size = 0x4, offset = 0x4, fixed_abs, tag = 'smem constant byte address 0x4 - core index']
  #allocation1 [shape = 'u32[144,128]{1,0:T(1,128)}', space=vmem, size = 0x12000, scoped, tag = 'internal scratch']
  #allocation2 [shape = 'bf16[256,36]{1,0:T(16,128)(2,1)}', space=vmem, size = 0x10000, scoped, tag = 'scratch operand']
  %s0 = inlined_call_operand.vmem [shape: bf16[2,18,18,4], index: 0, kind: input, shape index: {}]
  %s1 = inlined_call_operand.vmem [shape: bf16[36,128], index: 1, kind: input, shape index: {}]
  %s2 = inlined_call_operand.vmem [shape: f32[2,256,128], index: 2, kind: output, shape index: {0}]
  %s3 = inlined_call_operand.vmem [shape: f32[2,1,2,128], index: 3, kind: output, shape index: {1}]
  %4 = xla_tuple %s2, %s3
  %s5 = sld [smem:[#allocation0]]
  $region49: #{conv_transpose_block_forward.1} parent=0
    _
  %s7 = ssub.s32 1, %s5
  %s8 = scalar_select 0, %s7, %s5
  loop: start=0, step=1, limit=4
  $region2: #{conv_transpose_block_forward.1} parent=0 // loop_pre_header
    _
  $region3: #{conv_transpose_block_forward.1} parent=0 // loop_header
    %s10 = sphi 0, %s14
    %p11 = scmp.ge.s32.totalorder %s10, 4
    %s17 = sphi 0, %s29
    %s18 = sphi 0, %s25
    %s19 = sphi 0, %s17
    %s20 = sphi 0, %s18
    %s21 = sphi 0, %s19
    %s22 = sphi 0, %s20
    %s32 = sphi 0, %s34
    %s35 = sphi 0, %s32
    %s36 = sphi 0, %s35
    %s52 = sphi 0, %s36
    %s56 = sphi 0, %s56
    %s58 = sphi 0, %s56
    %s59 = sphi 0, %s58
    %s73 = sphi 0, %s59
    %s81 = sphi 0, %s83
    %s84 = sphi 0, %s81
    %s85 = sphi 0, %s84
    %s101 = sphi 0, %s85
    %s109 = sphi 0, %s111
    %s112 = sphi 0, %s109
    %s113 = sphi 0, %s112
    %s129 = sphi 0, %s113
  $region4: #{conv_transpose_block_forward.1} parent=0 // loop_header_branch
    %13 = sbr.rel (%p11) target = $region8
  $region5: #{conv_transpose_block_forward.1} parent=0 // loop_body
    %s15 = ssub.s32 %s10, 1
    %s16 = ssub.s32 %s10, 2
    %s23 = sadd.s32 1, %s18
    %p24 = scmp.ge.s32.totalorder %s23, 1
    %s25 = scalar_select %p24, 0, %s23
    %s26 = sadd.s32 1, %s17
    %s27 = scalar_select %p24, %s26, %s17
    %p28 = scmp.ge.s32.totalorder %s27, 2
    %s29 = scalar_select %p28, 0, %s27
    %s30 = ssub.s32 %s17, %s29
    %p31 = scmp.eq.s32.totalorder %s30, 0
    %s33 = sadd.s32 %s32, 1
    %s34 = scalar_select %p31, %s32, %s33
    %p37 = pneg %p31
    %p38 = scmp.eq.s32.totalorder %s10, 1
    %p39 = por %p37, %p38
    %p40 = scmp.ne.s32.totalorder %s32, %s35
    %p41 = scmp.eq.s32.totalorder %s10, 0
    %p42 = por %p40, %p41
    %p43 = scmp.ne.s32.totalorder %s32, %s35
    %p44 = scmp.eq.s32.totalorder %s15, 1
    %p45 = por %p43, %p44
    %p46 = scmp.ne.s32.totalorder %s35, %s36
    %p47 = scmp.eq.s32.totalorder %s15, 0
    %p48 = por %p46, %p47
    %p49 = scmp.ne.s32.totalorder %s35, %s36
    %p50 = scmp.eq.s32.totalorder %s16, 1
    %p51 = por %p49, %p50
    %p53 = scmp.ne.s32.totalorder %s36, %s52
    %p54 = scmp.eq.s32.totalorder %s16, 0
    %p55 = por %p53, %p54
    %s57 = sadd.s32 %s56, 1
    %p60 = scmp.eq.s32.totalorder %s10, 1
    %p61 = scmp.ne.s32.totalorder %s56, %s58
    %p62 = scmp.eq.s32.totalorder %s10, 0
    %p63 = por %p61, %p62
    %p64 = scmp.ne.s32.totalorder %s56, %s58
    %p65 = scmp.eq.s32.totalorder %s15, 1
    %p66 = por %p64, %p65
    %p67 = scmp.ne.s32.totalorder %s58, %s59
    %p68 = scmp.eq.s32.totalorder %s15, 0
    %p69 = por %p67, %p68
    %p70 = scmp.ne.s32.totalorder %s58, %s59
    %p71 = scmp.eq.s32.totalorder %s16, 1
    %p72 = por %p70, %p71
    %p74 = scmp.ne.s32.totalorder %s59, %s73
    %p75 = scmp.eq.s32.totalorder %s16, 0
    %p76 = por %p74, %p75
    %s77 = ssub.s32 %s17, %s29
    %s78 = ssub.s32 %s18, %s25
    %s79 = sor.u32 %s77, %s78
    %p80 = scmp.eq.s32.totalorder %s79, 0
    %s82 = sadd.s32 %s81, 1
    %s83 = scalar_select %p80, %s81, %s82
    %p86 = pneg %p80
    %p87 = scmp.eq.s32.totalorder %s10, 1
    %p88 = por %p86, %p87
    %p89 = scmp.ne.s32.totalorder %s81, %s84
    %p90 = scmp.eq.s32.totalorder %s10, 0
    %p91 = por %p89, %p90
    %p92 = scmp.ne.s32.totalorder %s81, %s84
    %p93 = scmp.eq.s32.totalorder %s15, 1
    %p94 = por %p92, %p93
    %p95 = scmp.ne.s32.totalorder %s84, %s85
    %p96 = scmp.eq.s32.totalorder %s15, 0
    %p97 = por %p95, %p96
    %p98 = scmp.ne.s32.totalorder %s84, %s85
    %p99 = scmp.eq.s32.totalorder %s16, 1
    %p100 = por %p98, %p99
    %p102 = scmp.ne.s32.totalorder %s85, %s101
    %p103 = scmp.eq.s32.totalorder %s16, 0
    %p104 = por %p102, %p103
    %s105 = ssub.s32 %s17, %s29
    %s106 = ssub.s32 %s18, %s25
    %s107 = sor.u32 %s105, %s106
    %p108 = scmp.eq.s32.totalorder %s107, 0
    %s110 = sadd.s32 %s109, 1
    %s111 = scalar_select %p108, %s109, %s110
    %p114 = pneg %p108
    %p115 = scmp.eq.s32.totalorder %s10, 1
    %p116 = por %p114, %p115
    %p117 = scmp.ne.s32.totalorder %s109, %s112
    %p118 = scmp.eq.s32.totalorder %s10, 0
    %p119 = por %p117, %p118
    %p120 = scmp.ne.s32.totalorder %s109, %s112
    %p121 = scmp.eq.s32.totalorder %s15, 1
    %p122 = por %p120, %p121
    %p123 = scmp.ne.s32.totalorder %s112, %s113
    %p124 = scmp.eq.s32.totalorder %s15, 0
    %p125 = por %p123, %p124
    %p126 = scmp.ne.s32.totalorder %s112, %s113
    %p127 = scmp.eq.s32.totalorder %s16, 1
    %p128 = por %p126, %p127
    %p130 = scmp.ne.s32.totalorder %s113, %s129
    %p131 = scmp.eq.s32.totalorder %s16, 0
    %p132 = por %p130, %p131
    %p133 = scmp.le.s32.totalorder 1, %s10
    %p134 = scmp.lt.s32.totalorder %s10, 3
    %p135 = pnand %p133, %p134
    %p136 = pneg %p135
    // Predicated region
    $region9: #{conv_transpose_block_forward.1} parent=5 // pred_check
      _
    $region10: #{conv_transpose_block_forward.1} parent=5 // pred_check_branch
      %138 = sbr.rel (%p135) target = $region12
    $region11: #{conv_transpose_block_forward.1} parent=5 // pred_region
      %s139 = ssub.s32 %s10, 1
      // Predicated region
      $region13: #{conv_transpose_block_forward.1} parent=11 // pred_check
        %p140 = pneg %p69
      $region14: #{conv_transpose_block_forward.1} parent=11 // pred_check_branch
        %142 = sbr.rel (%p140) target = $region16
      $region15: #{conv_transpose_block_forward.1} parent=11 // pred_region
        _
      $region16: #{conv_transpose_block_forward.1} parent=11 // pred_fallthru
        _
    $region12: #{conv_transpose_block_forward.1} parent=5 // pred_fallthru
      _
    %p143 = scmp.lt.s32.totalorder %s10, 2
    // Predicated region
    $region17: #{conv_transpose_block_forward.1} parent=5 // pred_check
      %p144 = pneg %p143
    $region18: #{conv_transpose_block_forward.1} parent=5 // pred_check_branch
      %146 = sbr.rel (%p144) target = $region20
    $region19: #{conv_transpose_block_forward.1} parent=5 // pred_region
      // Predicated region
      $region21: #{conv_transpose_block_forward.1} parent=19 // pred_check
        %p147 = pneg %p42
      $region22: #{conv_transpose_block_forward.1} parent=19 // pred_check_branch
        %149 = sbr.rel (%p147) target = $region24
      $region23: #{conv_transpose_block_forward.1} parent=19 // pred_region
        %p150 = scmp.lt.s32.totalorder %s17, 1
        %s151 = scalar_select %p150, %s17, 1
        %s152 = smul.addr %s151, 54
        %s153 = smul.addr %s152, 4
        %s154 = scalar_lea.vmem %s0, %s153
      $region24: #{conv_transpose_block_forward.1} parent=19 // pred_fallthru
        _
    $region20: #{conv_transpose_block_forward.1} parent=5 // pred_fallthru
      _
    %p155 = scmp.le.s32.totalorder 1, %s10
    %p156 = scmp.lt.s32.totalorder %s10, 3
    %p157 = pnand %p155, %p156
    %p158 = pneg %p157
    // Predicated region
    $region25: #{conv_transpose_block_forward.1} parent=5 // pred_check
      _
    $region26: #{conv_transpose_block_forward.1} parent=5 // pred_check_branch
      %160 = sbr.rel (%p157) target = $region28
    $region27: #{conv_transpose_block_forward.1} parent=5 // pred_region
      %s161 = ssub.s32 %s10, 1
      %p162 = scmp.lt.s32.totalorder %s19, 1
      %s163 = scalar_select %p162, %s19, 1
      %s164 = smul.addr %s163, 54
      %s165 = smul.addr %s164, 4
      %s166 = scalar_lea.vmem %s0, %s165
      %p167 = pneg %p48
      %p168 = pneg %p45
      %p169 = pneg %p69
      %p170 = pneg %p66
      %p171 = pneg %p97
      %p172 = pneg %p94
      %s173 = smul.u32 32, %s20
      %p174 = scmp.lt.s32.totalorder %s19, 1
      %s175 = scalar_select %p174, %s19, 1
      %p176 = scmp.lt.s32.totalorder %s173, 31
      %s177 = scalar_select %p176, %s173, 31
      %s178 = smul.addr %s175, 32
      %s179 = sadd.s32 %s177, %s178
      %s180 = smul.addr %s179, 8
      %s181 = scalar_lea.vmem %s2, %s180
      %p182 = pneg %p125
      %p183 = pneg %p122
      %p184 = scmp.lt.s32.totalorder %s19, 1
      %s185 = scalar_select %p184, %s19, 1
      %p186 = scmp.lt.s32.totalorder %s20, 0
      %s187 = scalar_select %p186, %s20, 0
      %s188 = sadd.s32 %s187, %s185
      %s189 = smul.addr %s188, 2
      %s190 = scalar_lea.vmem %s3, %s189
      %p191 = scmp.lt.s32.totalorder %s19, 1
      %s192 = scalar_select %p191, %s19, 1
      %s193 = smul.addr %s192, 54
      %s194 = smul.addr %s193, 4
      %s195 = scalar_lea.vmem %s0, %s194
      %s196 = smul.u32 32, %s20
      %p197 = scmp.lt.s32.totalorder %s19, 1
      %s198 = scalar_select %p197, %s19, 1
      %p199 = scmp.lt.s32.totalorder %s196, 31
      %s200 = scalar_select %p199, %s196, 31
      %s201 = smul.addr %s198, 32
      %s202 = sadd.s32 %s200, %s201
      %s203 = smul.addr %s202, 8
      %s204 = scalar_lea.vmem %s2, %s203
      %s205 = smul.u32 32, %s20
      %p206 = scmp.lt.s32.totalorder %s19, 1
      %s207 = scalar_select %p206, %s19, 1
      %p208 = scmp.lt.s32.totalorder %s20, 0
      %s209 = scalar_select %p208, %s20, 0
      %s210 = sadd.s32 %s209, %s207
      %s211 = smul.addr %s210, 2
      %s212 = scalar_lea.vmem %s3, %s211
      %s214 = smul.u32 %s20, 16
      %s215 = smul.u32 %s214, 3
      %s216 = smul.addr %s215, 4
      %s217 = scalar_lea.vmem %s195, %s216
      %v218 = vld [vmem:[%s217] sm:$0xf]
      %v219 = vld [vmem:[%s217 + $0x4] sm:$0xf]
      %v220 = vld [vmem:[%s217 + $0x8] sm:$0x1]
      %v221 = vld [vmem:[%s217 + $0xc] sm:$0xf]
      %v222 = vld [vmem:[%s217 + $0x10] sm:$0xf]
      %v223 = vld [vmem:[%s217 + $0x14] sm:$0x1]
      %v224 = vld [vmem:[%s217 + $0x18] sm:$0xf]
      %v225 = vld [vmem:[%s217 + $0x1c] sm:$0xf]
      %v226 = vld [vmem:[%s217 + $0x20] sm:$0x1]
      %v227 = vld [vmem:[%s217 + $0x24] sm:$0xf]
      %v228 = vld [vmem:[%s217 + $0x28] sm:$0xf]
      %v229 = vld [vmem:[%s217 + $0x2c] sm:$0x1]
      %v230 = vld [vmem:[%s217 + $0x30] sm:$0xf]
      %v231 = vld [vmem:[%s217 + $0x34] sm:$0xf]
      %v232 = vld [vmem:[%s217 + $0x38] sm:$0x1]
      %v233 = vld [vmem:[%s217 + $0x3c] sm:$0xf]
      %v234 = vld [vmem:[%s217 + $0x40] sm:$0xf]
      %v235 = vld [vmem:[%s217 + $0x44] sm:$0x1]
      %v236 = vld [vmem:[%s217 + $0x48] sm:$0xf]
      %v237 = vld [vmem:[%s217 + $0x4c] sm:$0xf]
      %v238 = vld [vmem:[%s217 + $0x50] sm:$0x1]
      %v239 = vld [vmem:[%s217 + $0x54] sm:$0xf]
      %v240 = vld [vmem:[%s217 + $0x58] sm:$0xf]
      %v241 = vld [vmem:[%s217 + $0x5c] sm:$0x1]
      %v242 = vld [vmem:[%s217 + $0x60] sm:$0xf]
      %v243 = vld [vmem:[%s217 + $0x64] sm:$0xf]
      %v244 = vld [vmem:[%s217 + $0x68] sm:$0x1]
      %v245 = vld [vmem:[%s217 + $0x6c] sm:$0xf]
      %v246 = vld [vmem:[%s217 + $0x70] sm:$0xf]
      %v247 = vld [vmem:[%s217 + $0x74] sm:$0x1]
      %v248 = vld [vmem:[%s217 + $0x78] sm:$0xf]
      %v249 = vld [vmem:[%s217 + $0x7c] sm:$0xf]
      %v250 = vld [vmem:[%s217 + $0x80] sm:$0x1]
      %v251 = vld [vmem:[%s217 + $0x84] sm:$0xf]
      %v252 = vld [vmem:[%s217 + $0x88] sm:$0xf]
      %v253 = vld [vmem:[%s217 + $0x8c] sm:$0x1]
      %v254 = vld [vmem:[%s217 + $0x90] sm:$0xf]
      %v255 = vld [vmem:[%s217 + $0x94] sm:$0xf]
      %v256 = vld [vmem:[%s217 + $0x98] sm:$0x1]
      %v257 = vld [vmem:[%s217 + $0x9c] sm:$0xf]
      %v258 = vld [vmem:[%s217 + $0xa0] sm:$0xf]
      %v259 = vld [vmem:[%s217 + $0xa4] sm:$0x1]
      %v260 = vld [vmem:[%s217 + $0xa8] sm:$0xf]
      %v261 = vld [vmem:[%s217 + $0xac] sm:$0xf]
      %v262 = vld [vmem:[%s217 + $0xb0] sm:$0x1]
      %v263 = vld [vmem:[%s217 + $0xb4] sm:$0xf]
      %v264 = vld [vmem:[%s217 + $0xb8] sm:$0xf]
      %v265 = vld [vmem:[%s217 + $0xbc] sm:$0x1]
      %v298 = vunpack.c.l.b16 %v218
      %v299 = vunpack.c.l.b16 %v219
      %v300 = vunpack.c.l.b16 %v221
      %v301 = vunpack.c.l.b16 %v222
      %v302 = vunpack.c.l.b16 %v224
      %v303 = vunpack.c.l.b16 %v225
      %v304 = vunpack.c.l.b16 %v227
      %v305 = vunpack.c.l.b16 %v228
      %v306 = vunpack.c.l.b16 %v230
      %v307 = vunpack.c.l.b16 %v231
      %v308 = vunpack.c.l.b16 %v233
      %v309 = vunpack.c.l.b16 %v234
      %v310 = vunpack.c.l.b16 %v236
      %v311 = vunpack.c.l.b16 %v237
      %v312 = vunpack.c.l.b16 %v239
      %v313 = vunpack.c.l.b16 %v240
      %v314 = vunpack.c.l.b16 %v242
      %v315 = vunpack.c.l.b16 %v243
      %v316 = vunpack.c.l.b16 %v245
      %v317 = vunpack.c.l.b16 %v246
      %v318 = vunpack.c.l.b16 %v248
      %v319 = vunpack.c.l.b16 %v249
      %v320 = vunpack.c.l.b16 %v251
      %v321 = vunpack.c.l.b16 %v252
      %v322 = vunpack.c.l.b16 %v254
      %v323 = vunpack.c.l.b16 %v255
      %v324 = vunpack.c.l.b16 %v257
      %v325 = vunpack.c.l.b16 %v258
      %v326 = vunpack.c.l.b16 %v260
      %v327 = vunpack.c.l.b16 %v261
      %v328 = vunpack.c.l.b16 %v263
      %v329 = vunpack.c.l.b16 %v264
      %v330 = vpack.c.b16 %v299, %v298
      %v331 = vpack.c.b16 %v301, %v300
      %v332 = vpack.c.b16 %v303, %v302
      %v333 = vpack.c.b16 %v305, %v304
      %v334 = vpack.c.b16 %v307, %v306
      %v335 = vpack.c.b16 %v309, %v308
      %v336 = vpack.c.b16 %v311, %v310
      %v337 = vpack.c.b16 %v313, %v312
      %v338 = vpack.c.b16 %v315, %v314
      %v339 = vpack.c.b16 %v317, %v316
      %v340 = vpack.c.b16 %v319, %v318
      %v341 = vpack.c.b16 %v321, %v320
      %v342 = vpack.c.b16 %v323, %v322
      %v343 = vpack.c.b16 %v325, %v324
      %v344 = vpack.c.b16 %v327, %v326
      %v345 = vpack.c.b16 %v329, %v328
      %vm362 = vcmask 31744
      %363 = vst.msk [vmem:[#allocation2] sm:$0xff] %vm362, %v330
      %364 = vst.msk [vmem:[#allocation2 + $0x8] sm:$0xff] %vm362, %v331
      %365 = vst.msk [vmem:[#allocation2 + $0x10] sm:$0xff] %vm362, %v332
      %366 = vst.msk [vmem:[#allocation2 + $0x18] sm:$0xff] %vm362, %v333
      %367 = vst.msk [vmem:[#allocation2 + $0x20] sm:$0xff] %vm362, %v334
      %368 = vst.msk [vmem:[#allocation2 + $0x28] sm:$0xff] %vm362, %v335
      %369 = vst.msk [vmem:[#allocation2 + $0x30] sm:$0xff] %vm362, %v336
      %370 = vst.msk [vmem:[#allocation2 + $0x38] sm:$0xff] %vm362, %v337
      %371 = vst.msk [vmem:[#allocation2 + $0x40] sm:$0xff] %vm362, %v338
      %372 = vst.msk [vmem:[#allocation2 + $0x48] sm:$0xff] %vm362, %v339
      %373 = vst.msk [vmem:[#allocation2 + $0x50] sm:$0xff] %vm362, %v340
      %374 = vst.msk [vmem:[#allocation2 + $0x58] sm:$0xff] %vm362, %v341
      %375 = vst.msk [vmem:[#allocation2 + $0x60] sm:$0xff] %vm362, %v342
      %376 = vst.msk [vmem:[#allocation2 + $0x68] sm:$0xff] %vm362, %v343
      %377 = vst.msk [vmem:[#allocation2 + $0x70] sm:$0xff] %vm362, %v344
      %378 = vst.msk [vmem:[#allocation2 + $0x78] sm:$0xff] %vm362, %v345
      %vm379 = vsmask.f32 3328
      %vm380 = vsmask.f32 7440
      %vm381 = vmor %vm379, %vm380
      %v383 = vshrl.u32 %v218, 16
      %v385 = vrot.slane %v383, 4
      %v386 = vshll.u32 %v218, 16
      %v388 = vrot.slane %v386, 5
      %v389 = vor.u32 %v385, %v388
      %v390 = vrot.slane %v389, 4
      %v392 = vshll.u32 %v219, 16
      %v394 = vrot.slane %v392, 5
      %v395 = vsel %vm381, %v390, %v394
      %v396 = vshrl.u32 %v219, 16
      %v398 = vrot.slane %v396, 4
      %v399 = vor.u32 %v398, %v394
      %v400 = vrot.slane %v399, 4
      %v402 = vshll.u32 %v220, 16
      %v404 = vrot.slane %v402, 5
      %v405 = vsel %vm381, %v400, %v404
      %v407 = vshrl.u32 %v221, 16
      %v409 = vrot.slane %v407, 4
      %v410 = vshll.u32 %v221, 16
      %v412 = vrot.slane %v410, 5
      %v413 = vor.u32 %v409, %v412
      %v414 = vrot.slane %v413, 4
      %v416 = vshll.u32 %v222, 16
      %v418 = vrot.slane %v416, 5
      %v419 = vsel %vm381, %v414, %v418
      %v420 = vshrl.u32 %v222, 16
      %v422 = vrot.slane %v420, 4
      %v423 = vor.u32 %v422, %v418
      %v424 = vrot.slane %v423, 4
      %v426 = vshll.u32 %v223, 16
      %v428 = vrot.slane %v426, 5
      %v429 = vsel %vm381, %v424, %v428
      %v431 = vshrl.u32 %v224, 16
      %v433 = vrot.slane %v431, 4
      %v434 = vshll.u32 %v224, 16
      %v436 = vrot.slane %v434, 5
      %v437 = vor.u32 %v433, %v436
      %v438 = vrot.slane %v437, 4
      %v440 = vshll.u32 %v225, 16
      %v442 = vrot.slane %v440, 5
      %v443 = vsel %vm381, %v438, %v442
      %v444 = vshrl.u32 %v225, 16
      %v446 = vrot.slane %v444, 4
      %v447 = vor.u32 %v446, %v442
      %v448 = vrot.slane %v447, 4
      %v450 = vshll.u32 %v226, 16
      %v452 = vrot.slane %v450, 5
      %v453 = vsel %vm381, %v448, %v452
      %v455 = vshrl.u32 %v227, 16
      %v457 = vrot.slane %v455, 4
      %v458 = vshll.u32 %v227, 16
      %v460 = vrot.slane %v458, 5
      %v461 = vor.u32 %v457, %v460
      %v462 = vrot.slane %v461, 4
      %v464 = vshll.u32 %v228, 16
      %v466 = vrot.slane %v464, 5
      %v467 = vsel %vm381, %v462, %v466
      %v468 = vshrl.u32 %v228, 16
      %v470 = vrot.slane %v468, 4
      %v471 = vor.u32 %v470, %v466
      %v472 = vrot.slane %v471, 4
      %v474 = vshll.u32 %v229, 16
      %v476 = vrot.slane %v474, 5
      %v477 = vsel %vm381, %v472, %v476
      %v479 = vshrl.u32 %v230, 16
      %v481 = vrot.slane %v479, 4
      %v482 = vshll.u32 %v230, 16
      %v484 = vrot.slane %v482, 5
      %v485 = vor.u32 %v481, %v484
      %v486 = vrot.slane %v485, 4
      %v488 = vshll.u32 %v231, 16
      %v490 = vrot.slane %v488, 5
      %v491 = vsel %vm381, %v486, %v490
      %v492 = vshrl.u32 %v231, 16
      %v494 = vrot.slane %v492, 4
      %v495 = vor.u32 %v494, %v490
      %v496 = vrot.slane %v495, 4
      %v498 = vshll.u32 %v232, 16
      %v500 = vrot.slane %v498, 5
      %v501 = vsel %vm381, %v496, %v500
      %v503 = vshrl.u32 %v233, 16
      %v505 = vrot.slane %v503, 4
      %v506 = vshll.u32 %v233, 16
      %v508 = vrot.slane %v506, 5
      %v509 = vor.u32 %v505, %v508
      %v510 = vrot.slane %v509, 4
      %v512 = vshll.u32 %v234, 16
      %v514 = vrot.slane %v512, 5
      %v515 = vsel %vm381, %v510, %v514
      %v516 = vshrl.u32 %v234, 16
      %v518 = vrot.slane %v516, 4
      %v519 = vor.u32 %v518, %v514
      %v520 = vrot.slane %v519, 4
      %v522 = vshll.u32 %v235, 16
      %v524 = vrot.slane %v522, 5
      %v525 = vsel %vm381, %v520, %v524
      %v527 = vshrl.u32 %v236, 16
      %v529 = vrot.slane %v527, 4
      %v530 = vshll.u32 %v236, 16
      %v532 = vrot.slane %v530, 5
      %v533 = vor.u32 %v529, %v532
      %v534 = vrot.slane %v533, 4
      %v536 = vshll.u32 %v237, 16
      %v538 = vrot.slane %v536, 5
      %v539 = vsel %vm381, %v534, %v538
      %v540 = vshrl.u32 %v237, 16
      %v542 = vrot.slane %v540, 4
      %v543 = vor.u32 %v542, %v538
      %v544 = vrot.slane %v543, 4
      %v546 = vshll.u32 %v238, 16
      %v548 = vrot.slane %v546, 5
      %v549 = vsel %vm381, %v544, %v548
      %v551 = vshrl.u32 %v239, 16
      %v553 = vrot.slane %v551, 4
      %v554 = vshll.u32 %v239, 16
      %v556 = vrot.slane %v554, 5
      %v557 = vor.u32 %v553, %v556
      %v558 = vrot.slane %v557, 4
      %v560 = vshll.u32 %v240, 16
      %v562 = vrot.slane %v560, 5
      %v563 = vsel %vm381, %v558, %v562
      %v564 = vshrl.u32 %v240, 16
      %v566 = vrot.slane %v564, 4
      %v567 = vor.u32 %v566, %v562
      %v568 = vrot.slane %v567, 4
      %v570 = vshll.u32 %v241, 16
      %v572 = vrot.slane %v570, 5
      %v573 = vsel %vm381, %v568, %v572
      %v575 = vshrl.u32 %v242, 16
      %v577 = vrot.slane %v575, 4
      %v578 = vshll.u32 %v242, 16
      %v580 = vrot.slane %v578, 5
      %v581 = vor.u32 %v577, %v580
      %v582 = vrot.slane %v581, 4
      %v584 = vshll.u32 %v243, 16
      %v586 = vrot.slane %v584, 5
      %v587 = vsel %vm381, %v582, %v586
      %v588 = vshrl.u32 %v243, 16
      %v590 = vrot.slane %v588, 4
      %v591 = vor.u32 %v590, %v586
      %v592 = vrot.slane %v591, 4
      %v594 = vshll.u32 %v244, 16
      %v596 = vrot.slane %v594, 5
      %v597 = vsel %vm381, %v592, %v596
      %v599 = vshrl.u32 %v245, 16
      %v601 = vrot.slane %v599, 4
      %v602 = vshll.u32 %v245, 16
      %v604 = vrot.slane %v602, 5
      %v605 = vor.u32 %v601, %v604
      %v606 = vrot.slane %v605, 4
      %v608 = vshll.u32 %v246, 16
      %v610 = vrot.slane %v608, 5
      %v611 = vsel %vm381, %v606, %v610
      %v612 = vshrl.u32 %v246, 16
      %v614 = vrot.slane %v612, 4
      %v615 = vor.u32 %v614, %v610
      %v616 = vrot.slane %v615, 4
      %v618 = vshll.u32 %v247, 16
      %v620 = vrot.slane %v618, 5
      %v621 = vsel %vm381, %v616, %v620
      %v623 = vshrl.u32 %v248, 16
      %v625 = vrot.slane %v623, 4
      %v626 = vshll.u32 %v248, 16
      %v628 = vrot.slane %v626, 5
      %v629 = vor.u32 %v625, %v628
      %v630 = vrot.slane %v629, 4
      %v632 = vshll.u32 %v249, 16
      %v634 = vrot.slane %v632, 5
      %v635 = vsel %vm381, %v630, %v634
      %v636 = vshrl.u32 %v249, 16
      %v638 = vrot.slane %v636, 4
      %v639 = vor.u32 %v638, %v634
      %v640 = vrot.slane %v639, 4
      %v642 = vshll.u32 %v250, 16
      %v644 = vrot.slane %v642, 5
      %v645 = vsel %vm381, %v640, %v644
      %v647 = vshrl.u32 %v251, 16
      %v649 = vrot.slane %v647, 4
      %v650 = vshll.u32 %v251, 16
      %v652 = vrot.slane %v650, 5
      %v653 = vor.u32 %v649, %v652
      %v654 = vrot.slane %v653, 4
      %v656 = vshll.u32 %v252, 16
      %v658 = vrot.slane %v656, 5
      %v659 = vsel %vm381, %v654, %v658
      %v660 = vshrl.u32 %v252, 16
      %v662 = vrot.slane %v660, 4
      %v663 = vor.u32 %v662, %v658
      %v664 = vrot.slane %v663, 4
      %v666 = vshll.u32 %v253, 16
      %v668 = vrot.slane %v666, 5
      %v669 = vsel %vm381, %v664, %v668
      %v671 = vshrl.u32 %v254, 16
      %v673 = vrot.slane %v671, 4
      %v674 = vshll.u32 %v254, 16
      %v676 = vrot.slane %v674, 5
      %v677 = vor.u32 %v673, %v676
      %v678 = vrot.slane %v677, 4
      %v680 = vshll.u32 %v255, 16
      %v682 = vrot.slane %v680, 5
      %v683 = vsel %vm381, %v678, %v682
      %v684 = vshrl.u32 %v255, 16
      %v686 = vrot.slane %v684, 4
      %v687 = vor.u32 %v686, %v682
      %v688 = vrot.slane %v687, 4
      %v690 = vshll.u32 %v256, 16
      %v692 = vrot.slane %v690, 5
      %v693 = vsel %vm381, %v688, %v692
      %v695 = vshrl.u32 %v257, 16
      %v697 = vrot.slane %v695, 4
      %v698 = vshll.u32 %v257, 16
      %v700 = vrot.slane %v698, 5
      %v701 = vor.u32 %v697, %v700
      %v702 = vrot.slane %v701, 4
      %v704 = vshll.u32 %v258, 16
      %v706 = vrot.slane %v704, 5
      %v707 = vsel %vm381, %v702, %v706
      %v708 = vshrl.u32 %v258, 16
      %v710 = vrot.slane %v708, 4
      %v711 = vor.u32 %v710, %v706
      %v712 = vrot.slane %v711, 4
      %v714 = vshll.u32 %v259, 16
      %v716 = vrot.slane %v714, 5
      %v717 = vsel %vm381, %v712, %v716
      %v719 = vshrl.u32 %v260, 16
      %v721 = vrot.slane %v719, 4
      %v722 = vshll.u32 %v260, 16
      %v724 = vrot.slane %v722, 5
      %v725 = vor.u32 %v721, %v724
      %v726 = vrot.slane %v725, 4
      %v728 = vshll.u32 %v261, 16
      %v730 = vrot.slane %v728, 5
      %v731 = vsel %vm381, %v726, %v730
      %v732 = vshrl.u32 %v261, 16
      %v734 = vrot.slane %v732, 4
      %v735 = vor.u32 %v734, %v730
      %v736 = vrot.slane %v735, 4
      %v738 = vshll.u32 %v262, 16
      %v740 = vrot.slane %v738, 5
      %v741 = vsel %vm381, %v736, %v740
      %v743 = vshrl.u32 %v263, 16
      %v745 = vrot.slane %v743, 4
      %v746 = vshll.u32 %v263, 16
      %v748 = vrot.slane %v746, 5
      %v749 = vor.u32 %v745, %v748
      %v750 = vrot.slane %v749, 4
      %v752 = vshll.u32 %v264, 16
      %v754 = vrot.slane %v752, 5
      %v755 = vsel %vm381, %v750, %v754
      %v756 = vshrl.u32 %v264, 16
      %v758 = vrot.slane %v756, 4
      %v759 = vor.u32 %v758, %v754
      %v760 = vrot.slane %v759, 4
      %v762 = vshll.u32 %v265, 16
      %v764 = vrot.slane %v762, 5
      %v765 = vsel %vm381, %v760, %v764
      %v766 = vunpack.c.l.b16 %v395
      %v767 = vunpack.c.l.b16 %v405
      %v768 = vunpack.c.l.b16 %v419
      %v769 = vunpack.c.l.b16 %v429
      %v770 = vunpack.c.l.b16 %v443
      %v771 = vunpack.c.l.b16 %v453
      %v772 = vunpack.c.l.b16 %v467
      %v773 = vunpack.c.l.b16 %v477
      %v774 = vunpack.c.l.b16 %v491
      %v775 = vunpack.c.l.b16 %v501
      %v776 = vunpack.c.l.b16 %v515
      %v777 = vunpack.c.l.b16 %v525
      %v778 = vunpack.c.l.b16 %v539
      %v779 = vunpack.c.l.b16 %v549
      %v780 = vunpack.c.l.b16 %v563
      %v781 = vunpack.c.l.b16 %v573
      %v782 = vunpack.c.l.b16 %v587
      %v783 = vunpack.c.l.b16 %v597
      %v784 = vunpack.c.l.b16 %v611
      %v785 = vunpack.c.l.b16 %v621
      %v786 = vunpack.c.l.b16 %v635
      %v787 = vunpack.c.l.b16 %v645
      %v788 = vunpack.c.l.b16 %v659
      %v789 = vunpack.c.l.b16 %v669
      %v790 = vunpack.c.l.b16 %v683
      %v791 = vunpack.c.l.b16 %v693
      %v792 = vunpack.c.l.b16 %v707
      %v793 = vunpack.c.l.b16 %v717
      %v794 = vunpack.c.l.b16 %v731
      %v795 = vunpack.c.l.b16 %v741
      %v796 = vunpack.c.l.b16 %v755
      %v797 = vunpack.c.l.b16 %v765
      %v798 = vpack.c.b16 %v767, %v766
      %v799 = vpack.c.b16 %v769, %v768
      %v800 = vpack.c.b16 %v771, %v770
      %v801 = vpack.c.b16 %v773, %v772
      %v802 = vpack.c.b16 %v775, %v774
      %v803 = vpack.c.b16 %v777, %v776
      %v804 = vpack.c.b16 %v779, %v778
      %v805 = vpack.c.b16 %v781, %v780
      %v806 = vpack.c.b16 %v783, %v782
      %v807 = vpack.c.b16 %v785, %v784
      %v808 = vpack.c.b16 %v787, %v786
      %v809 = vpack.c.b16 %v789, %v788
      %v810 = vpack.c.b16 %v791, %v790
      %v811 = vpack.c.b16 %v793, %v792
      %v812 = vpack.c.b16 %v795, %v794
      %v813 = vpack.c.b16 %v797, %v796
      %814 = vrot.lane.b32.xlu0 %v798, 4
      %v815 = vpop.permute.xlu0 %814
      %816 = vrot.lane.b32.xlu0 %v799, 4
      %v817 = vpop.permute.xlu0 %816
      %818 = vrot.lane.b32.xlu0 %v800, 4
      %v819 = vpop.permute.xlu0 %818
      %820 = vrot.lane.b32.xlu0 %v801, 4
      %v821 = vpop.permute.xlu0 %820
      %822 = vrot.lane.b32.xlu0 %v802, 4
      %v823 = vpop.permute.xlu0 %822
      %824 = vrot.lane.b32.xlu0 %v803, 4
      %v825 = vpop.permute.xlu0 %824
      %826 = vrot.lane.b32.xlu0 %v804, 4
      %v827 = vpop.permute.xlu0 %826
      %828 = vrot.lane.b32.xlu0 %v805, 4
      %v829 = vpop.permute.xlu0 %828
      %830 = vrot.lane.b32.xlu0 %v806, 4
      %v831 = vpop.permute.xlu0 %830
      %832 = vrot.lane.b32.xlu0 %v807, 4
      %v833 = vpop.permute.xlu0 %832
      %834 = vrot.lane.b32.xlu0 %v808, 4
      %v835 = vpop.permute.xlu0 %834
      %836 = vrot.lane.b32.xlu0 %v809, 4
      %v837 = vpop.permute.xlu0 %836
      %838 = vrot.lane.b32.xlu0 %v810, 4
      %v839 = vpop.permute.xlu0 %838
      %840 = vrot.lane.b32.xlu0 %v811, 4
      %v841 = vpop.permute.xlu0 %840
      %842 = vrot.lane.b32.xlu0 %v812, 4
      %v843 = vpop.permute.xlu0 %842
      %844 = vrot.lane.b32.xlu0 %v813, 4
      %v845 = vpop.permute.xlu0 %844
      %vm862 = vcmask 64544
      %863 = vst.msk [vmem:[#allocation2] sm:$0xff] %vm862, %v815
      %864 = vst.msk [vmem:[#allocation2 + $0x8] sm:$0xff] %vm862, %v817
      %865 = vst.msk [vmem:[#allocation2 + $0x10] sm:$0xff] %vm862, %v819
      %866 = vst.msk [vmem:[#allocation2 + $0x18] sm:$0xff] %vm862, %v821
      %867 = vst.msk [vmem:[#allocation2 + $0x20] sm:$0xff] %vm862, %v823
      %868 = vst.msk [vmem:[#allocation2 + $0x28] sm:$0xff] %vm862, %v825
      %869 = vst.msk [vmem:[#allocation2 + $0x30] sm:$0xff] %vm862, %v827
      %870 = vst.msk [vmem:[#allocation2 + $0x38] sm:$0xff] %vm862, %v829
      %871 = vst.msk [vmem:[#allocation2 + $0x40] sm:$0xff] %vm862, %v831
      %872 = vst.msk [vmem:[#allocation2 + $0x48] sm:$0xff] %vm862, %v833
      %873 = vst.msk [vmem:[#allocation2 + $0x50] sm:$0xff] %vm862, %v835
      %874 = vst.msk [vmem:[#allocation2 + $0x58] sm:$0xff] %vm862, %v837
      %875 = vst.msk [vmem:[#allocation2 + $0x60] sm:$0xff] %vm862, %v839
      %876 = vst.msk [vmem:[#allocation2 + $0x68] sm:$0xff] %vm862, %v841
      %877 = vst.msk [vmem:[#allocation2 + $0x70] sm:$0xff] %vm862, %v843
      %878 = vst.msk [vmem:[#allocation2 + $0x78] sm:$0xff] %vm862, %v845
      %vm895 = vcmask 1042432
      %vm896 = vcmask 1046532
      %vm897 = vmor %vm895, %vm896
      %v898 = vrot.slane %v218, 5
      %v899 = vrot.slane %v898, 4
      %v900 = vrot.slane %v219, 5
      %v901 = vsel %vm897, %v899, %v900
      %v902 = vrot.slane %v900, 4
      %v903 = vrot.slane %v220, 5
      %v904 = vsel %vm897, %v902, %v903
      %v905 = vrot.slane %v221, 5
      %v906 = vrot.slane %v905, 4
      %v907 = vrot.slane %v222, 5
      %v908 = vsel %vm897, %v906, %v907
      %v909 = vrot.slane %v907, 4
      %v910 = vrot.slane %v223, 5
      %v911 = vsel %vm897, %v909, %v910
      %v912 = vrot.slane %v224, 5
      %v913 = vrot.slane %v912, 4
      %v914 = vrot.slane %v225, 5
      %v915 = vsel %vm897, %v913, %v914
      %v916 = vrot.slane %v914, 4
      %v917 = vrot.slane %v226, 5
      %v918 = vsel %vm897, %v916, %v917
      %v919 = vrot.slane %v227, 5
      %v920 = vrot.slane %v919, 4
      %v921 = vrot.slane %v228, 5
      %v922 = vsel %vm897, %v920, %v921
      %v923 = vrot.slane %v921, 4
      %v924 = vrot.slane %v229, 5
      %v925 = vsel %vm897, %v923, %v924
      %v926 = vrot.slane %v230, 5
      %v927 = vrot.slane %v926, 4
      %v928 = vrot.slane %v231, 5
      %v929 = vsel %vm897, %v927, %v928
      %v930 = vrot.slane %v928, 4
      %v931 = vrot.slane %v232, 5
      %v932 = vsel %vm897, %v930, %v931
      %v933 = vrot.slane %v233, 5
      %v934 = vrot.slane %v933, 4
      %v935 = vrot.slane %v234, 5
      %v936 = vsel %vm897, %v934, %v935
      %v937 = vrot.slane %v935, 4
      %v938 = vrot.slane %v235, 5
      %v939 = vsel %vm897, %v937, %v938
      %v940 = vrot.slane %v236, 5
      %v941 = vrot.slane %v940, 4
      %v942 = vrot.slane %v237, 5
      %v943 = vsel %vm897, %v941, %v942
      %v944 = vrot.slane %v942, 4
      %v945 = vrot.slane %v238, 5
      %v946 = vsel %vm897, %v944, %v945
      %v947 = vrot.slane %v239, 5
      %v948 = vrot.slane %v947, 4
      %v949 = vrot.slane %v240, 5
      %v950 = vsel %vm897, %v948, %v949
      %v951 = vrot.slane %v949, 4
      %v952 = vrot.slane %v241, 5
      %v953 = vsel %vm897, %v951, %v952
      %v954 = vrot.slane %v242, 5
      %v955 = vrot.slane %v954, 4
      %v956 = vrot.slane %v243, 5
      %v957 = vsel %vm897, %v955, %v956
      %v958 = vrot.slane %v956, 4
      %v959 = vrot.slane %v244, 5
      %v960 = vsel %vm897, %v958, %v959
      %v961 = vrot.slane %v245, 5
      %v962 = vrot.slane %v961, 4
      %v963 = vrot.slane %v246, 5
      %v964 = vsel %vm897, %v962, %v963
      %v965 = vrot.slane %v963, 4
      %v966 = vrot.slane %v247, 5
      %v967 = vsel %vm897, %v965, %v966
      %v968 = vrot.slane %v248, 5
      %v969 = vrot.slane %v968, 4
      %v970 = vrot.slane %v249, 5
      %v971 = vsel %vm897, %v969, %v970
      %v972 = vrot.slane %v970, 4
      %v973 = vrot.slane %v250, 5
      %v974 = vsel %vm897, %v972, %v973
      %v975 = vrot.slane %v251, 5
      %v976 = vrot.slane %v975, 4
      %v977 = vrot.slane %v252, 5
      %v978 = vsel %vm897, %v976, %v977
      %v979 = vrot.slane %v977, 4
      %v980 = vrot.slane %v253, 5
      %v981 = vsel %vm897, %v979, %v980
      %v982 = vrot.slane %v254, 5
      %v983 = vrot.slane %v982, 4
      %v984 = vrot.slane %v255, 5
      %v985 = vsel %vm897, %v983, %v984
      %v986 = vrot.slane %v984, 4
      %v987 = vrot.slane %v256, 5
      %v988 = vsel %vm897, %v986, %v987
      %v989 = vrot.slane %v257, 5
      %v990 = vrot.slane %v989, 4
      %v991 = vrot.slane %v258, 5
      %v992 = vsel %vm897, %v990, %v991
      %v993 = vrot.slane %v991, 4
      %v994 = vrot.slane %v259, 5
      %v995 = vsel %vm897, %v993, %v994
      %v996 = vrot.slane %v260, 5
      %v997 = vrot.slane %v996, 4
      %v998 = vrot.slane %v261, 5
      %v999 = vsel %vm897, %v997, %v998
      %v1000 = vrot.slane %v998, 4
      %v1001 = vrot.slane %v262, 5
      %v1002 = vsel %vm897, %v1000, %v1001
      %v1003 = vrot.slane %v263, 5
      %v1004 = vrot.slane %v1003, 4
      %v1005 = vrot.slane %v264, 5
      %v1006 = vsel %vm897, %v1004, %v1005
      %v1007 = vrot.slane %v1005, 4
      %v1008 = vrot.slane %v265, 5
      %v1009 = vsel %vm897, %v1007, %v1008
      %v1010 = vunpack.c.l.b16 %v901
      %v1011 = vunpack.c.l.b16 %v904
      %v1012 = vunpack.c.l.b16 %v908
      %v1013 = vunpack.c.l.b16 %v911
      %v1014 = vunpack.c.l.b16 %v915
      %v1015 = vunpack.c.l.b16 %v918
      %v1016 = vunpack.c.l.b16 %v922
      %v1017 = vunpack.c.l.b16 %v925
      %v1018 = vunpack.c.l.b16 %v929
      %v1019 = vunpack.c.l.b16 %v932
      %v1020 = vunpack.c.l.b16 %v936
      %v1021 = vunpack.c.l.b16 %v939
      %v1022 = vunpack.c.l.b16 %v943
      %v1023 = vunpack.c.l.b16 %v946
      %v1024 = vunpack.c.l.b16 %v950
      %v1025 = vunpack.c.l.b16 %v953
      %v1026 = vunpack.c.l.b16 %v957
      %v1027 = vunpack.c.l.b16 %v960
      %v1028 = vunpack.c.l.b16 %v964
      %v1029 = vunpack.c.l.b16 %v967
      %v1030 = vunpack.c.l.b16 %v971
      %v1031 = vunpack.c.l.b16 %v974
      %v1032 = vunpack.c.l.b16 %v978
      %v1033 = vunpack.c.l.b16 %v981
      %v1034 = vunpack.c.l.b16 %v985
      %v1035 = vunpack.c.l.b16 %v988
      %v1036 = vunpack.c.l.b16 %v992
      %v1037 = vunpack.c.l.b16 %v995
      %v1038 = vunpack.c.l.b16 %v999
      %v1039 = vunpack.c.l.b16 %v1002
      %v1040 = vunpack.c.l.b16 %v1006
      %v1041 = vunpack.c.l.b16 %v1009
      %v1042 = vpack.c.b16 %v1011, %v1010
      %v1043 = vpack.c.b16 %v1013, %v1012
      %v1044 = vpack.c.b16 %v1015, %v1014
      %v1045 = vpack.c.b16 %v1017, %v1016
      %v1046 = vpack.c.b16 %v1019, %v1018
      %v1047 = vpack.c.b16 %v1021, %v1020
      %v1048 = vpack.c.b16 %v1023, %v1022
      %v1049 = vpack.c.b16 %v1025, %v1024
      %v1050 = vpack.c.b16 %v1027, %v1026
      %v1051 = vpack.c.b16 %v1029, %v1028
      %v1052 = vpack.c.b16 %v1031, %v1030
      %v1053 = vpack.c.b16 %v1033, %v1032
      %v1054 = vpack.c.b16 %v1035, %v1034
      %v1055 = vpack.c.b16 %v1037, %v1036
      %v1056 = vpack.c.b16 %v1039, %v1038
      %v1057 = vpack.c.b16 %v1041, %v1040
      %1058 = vrot.lane.b32.xlu0 %v1042, 8
      %v1059 = vpop.permute.xlu0 %1058
      %1060 = vrot.lane.b32.xlu0 %v1043, 8
      %v1061 = vpop.permute.xlu0 %1060
      %1062 = vrot.lane.b32.xlu0 %v1044, 8
      %v1063 = vpop.permute.xlu0 %1062
      %1064 = vrot.lane.b32.xlu0 %v1045, 8
      %v1065 = vpop.permute.xlu0 %1064
      %1066 = vrot.lane.b32.xlu0 %v1046, 8
      %v1067 = vpop.permute.xlu0 %1066
      %1068 = vrot.lane.b32.xlu0 %v1047, 8
      %v1069 = vpop.permute.xlu0 %1068
      %1070 = vrot.lane.b32.xlu0 %v1048, 8
      %v1071 = vpop.permute.xlu0 %1070
      %1072 = vrot.lane.b32.xlu0 %v1049, 8
      %v1073 = vpop.permute.xlu0 %1072
      %1074 = vrot.lane.b32.xlu0 %v1050, 8
      %v1075 = vpop.permute.xlu0 %1074
      %1076 = vrot.lane.b32.xlu0 %v1051, 8
      %v1077 = vpop.permute.xlu0 %1076
      %1078 = vrot.lane.b32.xlu0 %v1052, 8
      %v1079 = vpop.permute.xlu0 %1078
      %1080 = vrot.lane.b32.xlu0 %v1053, 8
      %v1081 = vpop.permute.xlu0 %1080
      %1082 = vrot.lane.b32.xlu0 %v1054, 8
      %v1083 = vpop.permute.xlu0 %1082
      %1084 = vrot.lane.b32.xlu0 %v1055, 8
      %v1085 = vpop.permute.xlu0 %1084
      %1086 = vrot.lane.b32.xlu0 %v1056, 8
      %v1087 = vpop.permute.xlu0 %1086
      %1088 = vrot.lane.b32.xlu0 %v1057, 8
      %v1089 = vpop.permute.xlu0 %1088
      %vm1106 = vcmask 97344
      %1107 = vst.msk [vmem:[#allocation2] sm:$0xff] %vm1106, %v1059
      %1108 = vst.msk [vmem:[#allocation2 + $0x8] sm:$0xff] %vm1106, %v1061
      %1109 = vst.msk [vmem:[#allocation2 + $0x10] sm:$0xff] %vm1106, %v1063
      %1110 = vst.msk [vmem:[#allocation2 + $0x18] sm:$0xff] %vm1106, %v1065
      %1111 = vst.msk [vmem:[#allocation2 + $0x20] sm:$0xff] %vm1106, %v1067
      %1112 = vst.msk [vmem:[#allocation2 + $0x28] sm:$0xff] %vm1106, %v1069
      %1113 = vst.msk [vmem:[#allocation2 + $0x30] sm:$0xff] %vm1106, %v1071
      %1114 = vst.msk [vmem:[#allocation2 + $0x38] sm:$0xff] %vm1106, %v1073
      %1115 = vst.msk [vmem:[#allocation2 + $0x40] sm:$0xff] %vm1106, %v1075
      %1116 = vst.msk [vmem:[#allocation2 + $0x48] sm:$0xff] %vm1106, %v1077
      %1117 = vst.msk [vmem:[#allocation2 + $0x50] sm:$0xff] %vm1106, %v1079
      %1118 = vst.msk [vmem:[#allocation2 + $0x58] sm:$0xff] %vm1106, %v1081
      %1119 = vst.msk [vmem:[#allocation2 + $0x60] sm:$0xff] %vm1106, %v1083
      %1120 = vst.msk [vmem:[#allocation2 + $0x68] sm:$0xff] %vm1106, %v1085
      %1121 = vst.msk [vmem:[#allocation2 + $0x70] sm:$0xff] %vm1106, %v1087
      %1122 = vst.msk [vmem:[#allocation2 + $0x78] sm:$0xff] %vm1106, %v1089
      %s1123 = sadd.s32 %s214, 1
      %s1124 = smul.u32 %s1123, 3
      %s1125 = smul.addr %s1124, 4
      %s1126 = scalar_lea.vmem %s195, %s1125
      %v1127 = vld [vmem:[%s1126] sm:$0xf]
      %v1128 = vld [vmem:[%s1126 + $0x4] sm:$0xf]
      %v1129 = vld [vmem:[%s1126 + $0x8] sm:$0x1]
      %v1130 = vld [vmem:[%s1126 + $0xc] sm:$0xf]
      %v1131 = vld [vmem:[%s1126 + $0x10] sm:$0xf]
      %v1132 = vld [vmem:[%s1126 + $0x14] sm:$0x1]
      %v1133 = vld [vmem:[%s1126 + $0x18] sm:$0xf]
      %v1134 = vld [vmem:[%s1126 + $0x1c] sm:$0xf]
      %v1135 = vld [vmem:[%s1126 + $0x20] sm:$0x1]
      %v1136 = vld [vmem:[%s1126 + $0x24] sm:$0xf]
      %v1137 = vld [vmem:[%s1126 + $0x28] sm:$0xf]
      %v1138 = vld [vmem:[%s1126 + $0x2c] sm:$0x1]
      %v1139 = vld [vmem:[%s1126 + $0x30] sm:$0xf]
      %v1140 = vld [vmem:[%s1126 + $0x34] sm:$0xf]
      %v1141 = vld [vmem:[%s1126 + $0x38] sm:$0x1]
      %v1142 = vld [vmem:[%s1126 + $0x3c] sm:$0xf]
      %v1143 = vld [vmem:[%s1126 + $0x40] sm:$0xf]
      %v1144 = vld [vmem:[%s1126 + $0x44] sm:$0x1]
      %v1145 = vld [vmem:[%s1126 + $0x48] sm:$0xf]
      %v1146 = vld [vmem:[%s1126 + $0x4c] sm:$0xf]
      %v1147 = vld [vmem:[%s1126 + $0x50] sm:$0x1]
      %v1148 = vld [vmem:[%s1126 + $0x54] sm:$0xf]
      %v1149 = vld [vmem:[%s1126 + $0x58] sm:$0xf]
      %v1150 = vld [vmem:[%s1126 + $0x5c] sm:$0x1]
      %v1151 = vld [vmem:[%s1126 + $0x60] sm:$0xf]
      %v1152 = vld [vmem:[%s1126 + $0x64] sm:$0xf]
      %v1153 = vld [vmem:[%s1126 + $0x68] sm:$0x1]
      %v1154 = vld [vmem:[%s1126 + $0x6c] sm:$0xf]
      %v1155 = vld [vmem:[%s1126 + $0x70] sm:$0xf]
      %v1156 = vld [vmem:[%s1126 + $0x74] sm:$0x1]
      %v1157 = vld [vmem:[%s1126 + $0x78] sm:$0xf]
      %v1158 = vld [vmem:[%s1126 + $0x7c] sm:$0xf]
      %v1159 = vld [vmem:[%s1126 + $0x80] sm:$0x1]
      %v1160 = vld [vmem:[%s1126 + $0x84] sm:$0xf]
      %v1161 = vld [vmem:[%s1126 + $0x88] sm:$0xf]
      %v1162 = vld [vmem:[%s1126 + $0x8c] sm:$0x1]
      %v1163 = vld [vmem:[%s1126 + $0x90] sm:$0xf]
      %v1164 = vld [vmem:[%s1126 + $0x94] sm:$0xf]
      %v1165 = vld [vmem:[%s1126 + $0x98] sm:$0x1]
      %v1166 = vld [vmem:[%s1126 + $0x9c] sm:$0xf]
      %v1167 = vld [vmem:[%s1126 + $0xa0] sm:$0xf]
      %v1168 = vld [vmem:[%s1126 + $0xa4] sm:$0x1]
      %v1169 = vld [vmem:[%s1126 + $0xa8] sm:$0xf]
      %v1170 = vld [vmem:[%s1126 + $0xac] sm:$0xf]
      %v1171 = vld [vmem:[%s1126 + $0xb0] sm:$0x1]
      %v1172 = vld [vmem:[%s1126 + $0xb4] sm:$0xf]
      %v1173 = vld [vmem:[%s1126 + $0xb8] sm:$0xf]
      %v1174 = vld [vmem:[%s1126 + $0xbc] sm:$0x1]
      %v1207 = vunpack.c.l.b16 %v1127
      %v1208 = vunpack.c.l.b16 %v1128
      %v1209 = vunpack.c.l.b16 %v1130
      %v1210 = vunpack.c.l.b16 %v1131
      %v1211 = vunpack.c.l.b16 %v1133
      %v1212 = vunpack.c.l.b16 %v1134
      %v1213 = vunpack.c.l.b16 %v1136
      %v1214 = vunpack.c.l.b16 %v1137
      %v1215 = vunpack.c.l.b16 %v1139
      %v1216 = vunpack.c.l.b16 %v1140
      %v1217 = vunpack.c.l.b16 %v1142
      %v1218 = vunpack.c.l.b16 %v1143
      %v1219 = vunpack.c.l.b16 %v1145
      %v1220 = vunpack.c.l.b16 %v1146
      %v1221 = vunpack.c.l.b16 %v1148
      %v1222 = vunpack.c.l.b16 %v1149
      %v1223 = vunpack.c.l.b16 %v1151
      %v1224 = vunpack.c.l.b16 %v1152
      %v1225 = vunpack.c.l.b16 %v1154
      %v1226 = vunpack.c.l.b16 %v1155
      %v1227 = vunpack.c.l.b16 %v1157
      %v1228 = vunpack.c.l.b16 %v1158
      %v1229 = vunpack.c.l.b16 %v1160
      %v1230 = vunpack.c.l.b16 %v1161
      %v1231 = vunpack.c.l.b16 %v1163
      %v1232 = vunpack.c.l.b16 %v1164
      %v1233 = vunpack.c.l.b16 %v1166
      %v1234 = vunpack.c.l.b16 %v1167
      %v1235 = vunpack.c.l.b16 %v1169
      %v1236 = vunpack.c.l.b16 %v1170
      %v1237 = vunpack.c.l.b16 %v1172
      %v1238 = vunpack.c.l.b16 %v1173
      %v1239 = vpack.c.b16 %v1208, %v1207
      %v1240 = vpack.c.b16 %v1210, %v1209
      %v1241 = vpack.c.b16 %v1212, %v1211
      %v1242 = vpack.c.b16 %v1214, %v1213
      %v1243 = vpack.c.b16 %v1216, %v1215
      %v1244 = vpack.c.b16 %v1218, %v1217
      %v1245 = vpack.c.b16 %v1220, %v1219
      %v1246 = vpack.c.b16 %v1222, %v1221
      %v1247 = vpack.c.b16 %v1224, %v1223
      %v1248 = vpack.c.b16 %v1226, %v1225
      %v1249 = vpack.c.b16 %v1228, %v1227
      %v1250 = vpack.c.b16 %v1230, %v1229
      %v1251 = vpack.c.b16 %v1232, %v1231
      %v1252 = vpack.c.b16 %v1234, %v1233
      %v1253 = vpack.c.b16 %v1236, %v1235
      %v1254 = vpack.c.b16 %v1238, %v1237
      %1255 = vrot.lane.b32.xlu0 %v1239, 12
      %v1256 = vpop.permute.xlu0 %1255
      %1257 = vrot.lane.b32.xlu0 %v1240, 12
      %v1258 = vpop.permute.xlu0 %1257
      %1259 = vrot.lane.b32.xlu0 %v1241, 12
      %v1260 = vpop.permute.xlu0 %1259
      %1261 = vrot.lane.b32.xlu0 %v1242, 12
      %v1262 = vpop.permute.xlu0 %1261
      %1263 = vrot.lane.b32.xlu0 %v1243, 12
      %v1264 = vpop.permute.xlu0 %1263
      %1265 = vrot.lane.b32.xlu0 %v1244, 12
      %v1266 = vpop.permute.xlu0 %1265
      %1267 = vrot.lane.b32.xlu0 %v1245, 12
      %v1268 = vpop.permute.xlu0 %1267
      %1269 = vrot.lane.b32.xlu0 %v1246, 12
      %v1270 = vpop.permute.xlu0 %1269
      %1271 = vrot.lane.b32.xlu0 %v1247, 12
      %v1272 = vpop.permute.xlu0 %1271
      %1273 = vrot.lane.b32.xlu0 %v1248, 12
      %v1274 = vpop.permute.xlu0 %1273
      %1275 = vrot.lane.b32.xlu0 %v1249, 12
      %v1276 = vpop.permute.xlu0 %1275
      %1277 = vrot.lane.b32.xlu0 %v1250, 12
      %v1278 = vpop.permute.xlu0 %1277
      %1279 = vrot.lane.b32.xlu0 %v1251, 12
      %v1280 = vpop.permute.xlu0 %1279
      %1281 = vrot.lane.b32.xlu0 %v1252, 12
      %v1282 = vpop.permute.xlu0 %1281
      %1283 = vrot.lane.b32.xlu0 %v1253, 12
      %v1284 = vpop.permute.xlu0 %1283
      %1285 = vrot.lane.b32.xlu0 %v1254, 12
      %v1286 = vpop.permute.xlu0 %1285
      %vm1303 = vcmask 130144
      %1304 = vst.msk [vmem:[#allocation2] sm:$0xff] %vm1303, %v1256
      %1305 = vst.msk [vmem:[#allocation2 + $0x8] sm:$0xff] %vm1303, %v1258
      %1306 = vst.msk [vmem:[#allocation2 + $0x10] sm:$0xff] %vm1303, %v1260
      %1307 = vst.msk [vmem:[#allocation2 + $0x18] sm:$0xff] %vm1303, %v1262
      %1308 = vst.msk [vmem:[#allocation2 + $0x20] sm:$0xff] %vm1303, %v1264
      %1309 = vst.msk [vmem:[#allocation2 + $0x28] sm:$0xff] %vm1303, %v1266
      %1310 = vst.msk [vmem:[#allocation2 + $0x30] sm:$0xff] %vm1303, %v1268
      %1311 = vst.msk [vmem:[#allocation2 + $0x38] sm:$0xff] %vm1303, %v1270
      %1312 = vst.msk [vmem:[#allocation2 + $0x40] sm:$0xff] %vm1303, %v1272
      %1313 = vst.msk [vmem:[#allocation2 + $0x48] sm:$0xff] %vm1303, %v1274
      %1314 = vst.msk [vmem:[#allocation2 + $0x50] sm:$0xff] %vm1303, %v1276
      %1315 = vst.msk [vmem:[#allocation2 + $0x58] sm:$0xff] %vm1303, %v1278
      %1316 = vst.msk [vmem:[#allocation2 + $0x60] sm:$0xff] %vm1303, %v1280
      %1317 = vst.msk [vmem:[#allocation2 + $0x68] sm:$0xff] %vm1303, %v1282
      %1318 = vst.msk [vmem:[#allocation2 + $0x70] sm:$0xff] %vm1303, %v1284
      %1319 = vst.msk [vmem:[#allocation2 + $0x78] sm:$0xff] %vm1303, %v1286
      %v1321 = vshrl.u32 %v1127, 16
      %v1323 = vrot.slane %v1321, 4
      %v1324 = vshll.u32 %v1127, 16
      %v1326 = vrot.slane %v1324, 5
      %v1327 = vor.u32 %v1323, %v1326
      %v1328 = vrot.slane %v1327, 4
      %v1330 = vshll.u32 %v1128, 16
      %v1332 = vrot.slane %v1330, 5
      %v1333 = vsel %vm381, %v1328, %v1332
      %v1334 = vshrl.u32 %v1128, 16
      %v1336 = vrot.slane %v1334, 4
      %v1337 = vor.u32 %v1336, %v1332
      %v1338 = vrot.slane %v1337, 4
      %v1340 = vshll.u32 %v1129, 16
      %v1342 = vrot.slane %v1340, 5
      %v1343 = vsel %vm381, %v1338, %v1342
      %v1345 = vshrl.u32 %v1130, 16
      %v1347 = vrot.slane %v1345, 4
      %v1348 = vshll.u32 %v1130, 16
      %v1350 = vrot.slane %v1348, 5
      %v1351 = vor.u32 %v1347, %v1350
      %v1352 = vrot.slane %v1351, 4
      %v1354 = vshll.u32 %v1131, 16
      %v1356 = vrot.slane %v1354, 5
      %v1357 = vsel %vm381, %v1352, %v1356
      %v1358 = vshrl.u32 %v1131, 16
      %v1360 = vrot.slane %v1358, 4
      %v1361 = vor.u32 %v1360, %v1356
      %v1362 = vrot.slane %v1361, 4
      %v1364 = vshll.u32 %v1132, 16
      %v1366 = vrot.slane %v1364, 5
      %v1367 = vsel %vm381, %v1362, %v1366
      %v1369 = vshrl.u32 %v1133, 16
      %v1371 = vrot.slane %v1369, 4
      %v1372 = vshll.u32 %v1133, 16
      %v1374 = vrot.slane %v1372, 5
      %v1375 = vor.u32 %v1371, %v1374
      %v1376 = vrot.slane %v1375, 4
      %v1378 = vshll.u32 %v1134, 16
      %v1380 = vrot.slane %v1378, 5
      %v1381 = vsel %vm381, %v1376, %v1380
      %v1382 = vshrl.u32 %v1134, 16
      %v1384 = vrot.slane %v1382, 4
      %v1385 = vor.u32 %v1384, %v1380
      %v1386 = vrot.slane %v1385, 4
      %v1388 = vshll.u32 %v1135, 16
      %v1390 = vrot.slane %v1388, 5
      %v1391 = vsel %vm381, %v1386, %v1390
      %v1393 = vshrl.u32 %v1136, 16
      %v1395 = vrot.slane %v1393, 4
      %v1396 = vshll.u32 %v1136, 16
      %v1398 = vrot.slane %v1396, 5
      %v1399 = vor.u32 %v1395, %v1398
      %v1400 = vrot.slane %v1399, 4
      %v1402 = vshll.u32 %v1137, 16
      %v1404 = vrot.slane %v1402, 5
      %v1405 = vsel %vm381, %v1400, %v1404
      %v1406 = vshrl.u32 %v1137, 16
      %v1408 = vrot.slane %v1406, 4
      %v1409 = vor.u32 %v1408, %v1404
      %v1410 = vrot.slane %v1409, 4
      %v1412 = vshll.u32 %v1138, 16
      %v1414 = vrot.slane %v1412, 5
      %v1415 = vsel %vm381, %v1410, %v1414
      %v1417 = vshrl.u32 %v1139, 16
      %v1419 = vrot.slane %v1417, 4
      %v1420 = vshll.u32 %v1139, 16
      %v1422 = vrot.slane %v1420, 5
      %v1423 = vor.u32 %v1419, %v1422
      %v1424 = vrot.slane %v1423, 4
      %v1426 = vshll.u32 %v1140, 16
      %v1428 = vrot.slane %v1426, 5
      %v1429 = vsel %vm381, %v1424, %v1428
      %v1430 = vshrl.u32 %v1140, 16
      %v1432 = vrot.slane %v1430, 4
      %v1433 = vor.u32 %v1432, %v1428
      %v1434 = vrot.slane %v1433, 4
      %v1436 = vshll.u32 %v1141, 16
      %v1438 = vrot.slane %v1436, 5
      %v1439 = vsel %vm381, %v1434, %v1438
      %v1441 = vshrl.u32 %v1142, 16
      %v1443 = vrot.slane %v1441, 4
      %v1444 = vshll.u32 %v1142, 16
      %v1446 = vrot.slane %v1444, 5
      %v1447 = vor.u32 %v1443, %v1446
      %v1448 = vrot.slane %v1447, 4
      %v1450 = vshll.u32 %v1143, 16
      %v1452 = vrot.slane %v1450, 5
      %v1453 = vsel %vm381, %v1448, %v1452
      %v1454 = vshrl.u32 %v1143, 16
      %v1456 = vrot.slane %v1454, 4
      %v1457 = vor.u32 %v1456, %v1452
      %v1458 = vrot.slane %v1457, 4
      %v1460 = vshll.u32 %v1144, 16
      %v1462 = vrot.slane %v1460, 5
      %v1463 = vsel %vm381, %v1458, %v1462
      %v1465 = vshrl.u32 %v1145, 16
      %v1467 = vrot.slane %v1465, 4
      %v1468 = vshll.u32 %v1145, 16
      %v1470 = vrot.slane %v1468, 5
      %v1471 = vor.u32 %v1467, %v1470
      %v1472 = vrot.slane %v1471, 4
      %v1474 = vshll.u32 %v1146, 16
      %v1476 = vrot.slane %v1474, 5
      %v1477 = vsel %vm381, %v1472, %v1476
      %v1478 = vshrl.u32 %v1146, 16
      %v1480 = vrot.slane %v1478, 4
      %v1481 = vor.u32 %v1480, %v1476
      %v1482 = vrot.slane %v1481, 4
      %v1484 = vshll.u32 %v1147, 16
      %v1486 = vrot.slane %v1484, 5
      %v1487 = vsel %vm381, %v1482, %v1486
      %v1489 = vshrl.u32 %v1148, 16
      %v1491 = vrot.slane %v1489, 4
      %v1492 = vshll.u32 %v1148, 16
      %v1494 = vrot.slane %v1492, 5
      %v1495 = vor.u32 %v1491, %v1494
      %v1496 = vrot.slane %v1495, 4
      %v1498 = vshll.u32 %v1149, 16
      %v1500 = vrot.slane %v1498, 5
      %v1501 = vsel %vm381, %v1496, %v1500
      %v1502 = vshrl.u32 %v1149, 16
      %v1504 = vrot.slane %v1502, 4
      %v1505 = vor.u32 %v1504, %v1500
      %v1506 = vrot.slane %v1505, 4
      %v1508 = vshll.u32 %v1150, 16
      %v1510 = vrot.slane %v1508, 5
      %v1511 = vsel %vm381, %v1506, %v1510
      %v1513 = vshrl.u32 %v1151, 16
      %v1515 = vrot.slane %v1513, 4
      %v1516 = vshll.u32 %v1151, 16
      %v1518 = vrot.slane %v1516, 5
      %v1519 = vor.u32 %v1515, %v1518
      %v1520 = vrot.slane %v1519, 4
      %v1522 = vshll.u32 %v1152, 16
      %v1524 = vrot.slane %v1522, 5
      %v1525 = vsel %vm381, %v1520, %v1524
      %v1526 = vshrl.u32 %v1152, 16
      %v1528 = vrot.slane %v1526, 4
      %v1529 = vor.u32 %v1528, %v1524
      %v1530 = vrot.slane %v1529, 4
      %v1532 = vshll.u32 %v1153, 16
      %v1534 = vrot.slane %v1532, 5
      %v1535 = vsel %vm381, %v1530, %v1534
      %v1537 = vshrl.u32 %v1154, 16
      %v1539 = vrot.slane %v1537, 4
      %v1540 = vshll.u32 %v1154, 16
      %v1542 = vrot.slane %v1540, 5
      %v1543 = vor.u32 %v1539, %v1542
      %v1544 = vrot.slane %v1543, 4
      %v1546 = vshll.u32 %v1155, 16
      %v1548 = vrot.slane %v1546, 5
      %v1549 = vsel %vm381, %v1544, %v1548
      %v1550 = vshrl.u32 %v1155, 16
      %v1552 = vrot.slane %v1550, 4
      %v1553 = vor.u32 %v1552, %v1548
      %v1554 = vrot.slane %v1553, 4
      %v1556 = vshll.u32 %v1156, 16
      %v1558 = vrot.slane %v1556, 5
      %v1559 = vsel %vm381, %v1554, %v1558
      %v1561 = vshrl.u32 %v1157, 16
      %v1563 = vrot.slane %v1561, 4
      %v1564 = vshll.u32 %v1157, 16
      %v1566 = vrot.slane %v1564, 5
      %v1567 = vor.u32 %v1563, %v1566
      %v1568 = vrot.slane %v1567, 4
      %v1570 = vshll.u32 %v1158, 16
      %v1572 = vrot.slane %v1570, 5
      %v1573 = vsel %vm381, %v1568, %v1572
      %v1574 = vshrl.u32 %v1158, 16
      %v1576 = vrot.slane %v1574, 4
      %v1577 = vor.u32 %v1576, %v1572
      %v1578 = vrot.slane %v1577, 4
      %v1580 = vshll.u32 %v1159, 16
      %v1582 = vrot.slane %v1580, 5
      %v1583 = vsel %vm381, %v1578, %v1582
      %v1585 = vshrl.u32 %v1160, 16
      %v1587 = vrot.slane %v1585, 4
      %v1588 = vshll.u32 %v1160, 16
      %v1590 = vrot.slane %v1588, 5
      %v1591 = vor.u32 %v1587, %v1590
      %v1592 = vrot.slane %v1591, 4
      %v1594 = vshll.u32 %v1161, 16
      %v1596 = vrot.slane %v1594, 5
      %v1597 = vsel %vm381, %v1592, %v1596
      %v1598 = vshrl.u32 %v1161, 16
      %v1600 = vrot.slane %v1598, 4
      %v1601 = vor.u32 %v1600, %v1596
      %v1602 = vrot.slane %v1601, 4
      %v1604 = vshll.u32 %v1162, 16
      %v1606 = vrot.slane %v1604, 5
      %v1607 = vsel %vm381, %v1602, %v1606
      %v1609 = vshrl.u32 %v1163, 16
      %v1611 = vrot.slane %v1609, 4
      %v1612 = vshll.u32 %v1163, 16
      %v1614 = vrot.slane %v1612, 5
      %v1615 = vor.u32 %v1611, %v1614
      %v1616 = vrot.slane %v1615, 4
      %v1618 = vshll.u32 %v1164, 16
      %v1620 = vrot.slane %v1618, 5
      %v1621 = vsel %vm381, %v1616, %v1620
      %v1622 = vshrl.u32 %v1164, 16
      %v1624 = vrot.slane %v1622, 4
      %v1625 = vor.u32 %v1624, %v1620
      %v1626 = vrot.slane %v1625, 4
      %v1628 = vshll.u32 %v1165, 16
      %v1630 = vrot.slane %v1628, 5
      %v1631 = vsel %vm381, %v1626, %v1630
      %v1633 = vshrl.u32 %v1166, 16
      %v1635 = vrot.slane %v1633, 4
      %v1636 = vshll.u32 %v1166, 16
      %v1638 = vrot.slane %v1636, 5
      %v1639 = vor.u32 %v1635, %v1638
      %v1640 = vrot.slane %v1639, 4
      %v1642 = vshll.u32 %v1167, 16
      %v1644 = vrot.slane %v1642, 5
      %v1645 = vsel %vm381, %v1640, %v1644
      %v1646 = vshrl.u32 %v1167, 16
      %v1648 = vrot.slane %v1646, 4
      %v1649 = vor.u32 %v1648, %v1644
      %v1650 = vrot.slane %v1649, 4
      %v1652 = vshll.u32 %v1168, 16
      %v1654 = vrot.slane %v1652, 5
      %v1655 = vsel %vm381, %v1650, %v1654
      %v1657 = vshrl.u32 %v1169, 16
      %v1659 = vrot.slane %v1657, 4
      %v1660 = vshll.u32 %v1169, 16
      %v1662 = vrot.slane %v1660, 5
      %v1663 = vor.u32 %v1659, %v1662
      %v1664 = vrot.slane %v1663, 4
      %v1666 = vshll.u32 %v1170, 16
      %v1668 = vrot.slane %v1666, 5
      %v1669 = vsel %vm381, %v1664, %v1668
      %v1670 = vshrl.u32 %v1170, 16
      %v1672 = vrot.slane %v1670, 4
      %v1673 = vor.u32 %v1672, %v1668
      %v1674 = vrot.slane %v1673, 4
      %v1676 = vshll.u32 %v1171, 16
      %v1678 = vrot.slane %v1676, 5
      %v1679 = vsel %vm381, %v1674, %v1678
      %v1681 = vshrl.u32 %v1172, 16
      %v1683 = vrot.slane %v1681, 4
      %v1684 = vshll.u32 %v1172, 16
      %v1686 = vrot.slane %v1684, 5
      %v1687 = vor.u32 %v1683, %v1686
      %v1688 = vrot.slane %v1687, 4
      %v1690 = vshll.u32 %v1173, 16
      %v1692 = vrot.slane %v1690, 5
      %v1693 = vsel %vm381, %v1688, %v1692
      %v1694 = vshrl.u32 %v1173, 16
      %v1696 = vrot.slane %v1694, 4
      %v1697 = vor.u32 %v1696, %v1692
      %v1698 = vrot.slane %v1697, 4
      %v1700 = vshll.u32 %v1174, 16
      %v1702 = vrot.slane %v1700, 5
      %v1703 = vsel %vm381, %v1698, %v1702
      %v1704 = vunpack.c.l.b16 %v1333
      %v1705 = vunpack.c.l.b16 %v1343
      %v1706 = vunpack.c.l.b16 %v1357
      %v1707 = vunpack.c.l.b16 %v1367
      %v1708 = vunpack.c.l.b16 %v1381
      %v1709 = vunpack.c.l.b16 %v1391
      %v1710 = vunpack.c.l.b16 %v1405
      %v1711 = vunpack.c.l.b16 %v1415
      %v1712 = vunpack.c.l.b16 %v1429
      %v1713 = vunpack.c.l.b16 %v1439
      %v1714 = vunpack.c.l.b16 %v1453
      %v1715 = vunpack.c.l.b16 %v1463
      %v1716 = vunpack.c.l.b16 %v1477
      %v1717 = vunpack.c.l.b16 %v1487
      %v1718 = vunpack.c.l.b16 %v1501
      %v1719 = vunpack.c.l.b16 %v1511
      %v1720 = vunpack.c.l.b16 %v1525
      %v1721 = vunpack.c.l.b16 %v1535
      %v1722 = vunpack.c.l.b16 %v1549
      %v1723 = vunpack.c.l.b16 %v1559
      %v1724 = vunpack.c.l.b16 %v1573
      %v1725 = vunpack.c.l.b16 %v1583
      %v1726 = vunpack.c.l.b16 %v1597
      %v1727 = vunpack.c.l.b16 %v1607
      %v1728 = vunpack.c.l.b16 %v1621
      %v1729 = vunpack.c.l.b16 %v1631
      %v1730 = vunpack.c.l.b16 %v1645
      %v1731 = vunpack.c.l.b16 %v1655
      %v1732 = vunpack.c.l.b16 %v1669
      %v1733 = vunpack.c.l.b16 %v1679
      %v1734 = vunpack.c.l.b16 %v1693
      %v1735 = vunpack.c.l.b16 %v1703
      %v1736 = vpack.c.b16 %v1705, %v1704
      %v1737 = vpack.c.b16 %v1707, %v1706
      %v1738 = vpack.c.b16 %v1709, %v1708
      %v1739 = vpack.c.b16 %v1711, %v1710
      %v1740 = vpack.c.b16 %v1713, %v1712
      %v1741 = vpack.c.b16 %v1715, %v1714
      %v1742 = vpack.c.b16 %v1717, %v1716
      %v1743 = vpack.c.b16 %v1719, %v1718
      %v1744 = vpack.c.b16 %v1721, %v1720
      %v1745 = vpack.c.b16 %v1723, %v1722
      %v1746 = vpack.c.b16 %v1725, %v1724
      %v1747 = vpack.c.b16 %v1727, %v1726
      %v1748 = vpack.c.b16 %v1729, %v1728
      %v1749 = vpack.c.b16 %v1731, %v1730
      %v1750 = vpack.c.b16 %v1733, %v1732
      %v1751 = vpack.c.b16 %v1735, %v1734
      %1752 = vrot.lane.b32.xlu0 %v1736, 16
      %v1753 = vpop.permute.xlu0 %1752
      %1754 = vrot.lane.b32.xlu0 %v1737, 16
      %v1755 = vpop.permute.xlu0 %1754
      %1756 = vrot.lane.b32.xlu0 %v1738, 16
      %v1757 = vpop.permute.xlu0 %1756
      %1758 = vrot.lane.b32.xlu0 %v1739, 16
      %v1759 = vpop.permute.xlu0 %1758
      %1760 = vrot.lane.b32.xlu0 %v1740, 16
      %v1761 = vpop.permute.xlu0 %1760
      %1762 = vrot.lane.b32.xlu0 %v1741, 16
      %v1763 = vpop.permute.xlu0 %1762
      %1764 = vrot.lane.b32.xlu0 %v1742, 16
      %v1765 = vpop.permute.xlu0 %1764
      %1766 = vrot.lane.b32.xlu0 %v1743, 16
      %v1767 = vpop.permute.xlu0 %1766
      %1768 = vrot.lane.b32.xlu0 %v1744, 16
      %v1769 = vpop.permute.xlu0 %1768
      %1770 = vrot.lane.b32.xlu0 %v1745, 16
      %v1771 = vpop.permute.xlu0 %1770
      %1772 = vrot.lane.b32.xlu0 %v1746, 16
      %v1773 = vpop.permute.xlu0 %1772
      %1774 = vrot.lane.b32.xlu0 %v1747, 16
      %v1775 = vpop.permute.xlu0 %1774
      %1776 = vrot.lane.b32.xlu0 %v1748, 16
      %v1777 = vpop.permute.xlu0 %1776
      %1778 = vrot.lane.b32.xlu0 %v1749, 16
      %v1779 = vpop.permute.xlu0 %1778
      %1780 = vrot.lane.b32.xlu0 %v1750, 16
      %v1781 = vpop.permute.xlu0 %1780
      %1782 = vrot.lane.b32.xlu0 %v1751, 16
      %v1783 = vpop.permute.xlu0 %1782
      %vm1800 = vcmask 162944
      %1801 = vst.msk [vmem:[#allocation2] sm:$0xff] %vm1800, %v1753
      %1802 = vst.msk [vmem:[#allocation2 + $0x8] sm:$0xff] %vm1800, %v1755
      %1803 = vst.msk [vmem:[#allocation2 + $0x10] sm:$0xff] %vm1800, %v1757
      %1804 = vst.msk [vmem:[#allocation2 + $0x18] sm:$0xff] %vm1800, %v1759
      %1805 = vst.msk [vmem:[#allocation2 + $0x20] sm:$0xff] %vm1800, %v1761
      %1806 = vst.msk [vmem:[#allocation2 + $0x28] sm:$0xff] %vm1800, %v1763
      %1807 = vst.msk [vmem:[#allocation2 + $0x30] sm:$0xff] %vm1800, %v1765
      %1808 = vst.msk [vmem:[#allocation2 + $0x38] sm:$0xff] %vm1800, %v1767
      %1809 = vst.msk [vmem:[#allocation2 + $0x40] sm:$0xff] %vm1800, %v1769
      %1810 = vst.msk [vmem:[#allocation2 + $0x48] sm:$0xff] %vm1800, %v1771
      %1811 = vst.msk [vmem:[#allocation2 + $0x50] sm:$0xff] %vm1800, %v1773
      %1812 = vst.msk [vmem:[#allocation2 + $0x58] sm:$0xff] %vm1800, %v1775
      %1813 = vst.msk [vmem:[#allocation2 + $0x60] sm:$0xff] %vm1800, %v1777
      %1814 = vst.msk [vmem:[#allocation2 + $0x68] sm:$0xff] %vm1800, %v1779
      %1815 = vst.msk [vmem:[#allocation2 + $0x70] sm:$0xff] %vm1800, %v1781
      %1816 = vst.msk [vmem:[#allocation2 + $0x78] sm:$0xff] %vm1800, %v1783
      %v1833 = vrot.slane %v1127, 5
      %v1834 = vrot.slane %v1833, 4
      %v1835 = vrot.slane %v1128, 5
      %v1836 = vsel %vm897, %v1834, %v1835
      %v1837 = vrot.slane %v1835, 4
      %v1838 = vrot.slane %v1129, 5
      %v1839 = vsel %vm897, %v1837, %v1838
      %v1840 = vrot.slane %v1130, 5
      %v1841 = vrot.slane %v1840, 4
      %v1842 = vrot.slane %v1131, 5
      %v1843 = vsel %vm897, %v1841, %v1842
      %v1844 = vrot.slane %v1842, 4
      %v1845 = vrot.slane %v1132, 5
      %v1846 = vsel %vm897, %v1844, %v1845
      %v1847 = vrot.slane %v1133, 5
      %v1848 = vrot.slane %v1847, 4
      %v1849 = vrot.slane %v1134, 5
      %v1850 = vsel %vm897, %v1848, %v1849
      %v1851 = vrot.slane %v1849, 4
      %v1852 = vrot.slane %v1135, 5
      %v1853 = vsel %vm897, %v1851, %v1852
      %v1854 = vrot.slane %v1136, 5
      %v1855 = vrot.slane %v1854, 4
      %v1856 = vrot.slane %v1137, 5
      %v1857 = vsel %vm897, %v1855, %v1856
      %v1858 = vrot.slane %v1856, 4
      %v1859 = vrot.slane %v1138, 5
      %v1860 = vsel %vm897, %v1858, %v1859
      %v1861 = vrot.slane %v1139, 5
      %v1862 = vrot.slane %v1861, 4
      %v1863 = vrot.slane %v1140, 5
      %v1864 = vsel %vm897, %v1862, %v1863
      %v1865 = vrot.slane %v1863, 4
      %v1866 = vrot.slane %v1141, 5
      %v1867 = vsel %vm897, %v1865, %v1866
      %v1868 = vrot.slane %v1142, 5
      %v1869 = vrot.slane %v1868, 4
      %v1870 = vrot.slane %v1143, 5
      %v1871 = vsel %vm897, %v1869, %v1870
      %v1872 = vrot.slane %v1870, 4
      %v1873 = vrot.slane %v1144, 5
      %v1874 = vsel %vm897, %v1872, %v1873
      %v1875 = vrot.slane %v1145, 5
      %v1876 = vrot.slane %v1875, 4
      %v1877 = vrot.slane %v1146, 5
      %v1878 = vsel %vm897, %v1876, %v1877
      %v1879 = vrot.slane %v1877, 4
      %v1880 = vrot.slane %v1147, 5
      %v1881 = vsel %vm897, %v1879, %v1880
      %v1882 = vrot.slane %v1148, 5
      %v1883 = vrot.slane %v1882, 4
      %v1884 = vrot.slane %v1149, 5
      %v1885 = vsel %vm897, %v1883, %v1884
      %v1886 = vrot.slane %v1884, 4
      %v1887 = vrot.slane %v1150, 5
      %v1888 = vsel %vm897, %v1886, %v1887
      %v1889 = vrot.slane %v1151, 5
      %v1890 = vrot.slane %v1889, 4
      %v1891 = vrot.slane %v1152, 5
      %v1892 = vsel %vm897, %v1890, %v1891
      %v1893 = vrot.slane %v1891, 4
      %v1894 = vrot.slane %v1153, 5
      %v1895 = vsel %vm897, %v1893, %v1894
      %v1896 = vrot.slane %v1154, 5
      %v1897 = vrot.slane %v1896, 4
      %v1898 = vrot.slane %v1155, 5
      %v1899 = vsel %vm897, %v1897, %v1898
      %v1900 = vrot.slane %v1898, 4
      %v1901 = vrot.slane %v1156, 5
      %v1902 = vsel %vm897, %v1900, %v1901
      %v1903 = vrot.slane %v1157, 5
      %v1904 = vrot.slane %v1903, 4
      %v1905 = vrot.slane %v1158, 5
      %v1906 = vsel %vm897, %v1904, %v1905
      %v1907 = vrot.slane %v1905, 4
      %v1908 = vrot.slane %v1159, 5
      %v1909 = vsel %vm897, %v1907, %v1908
      %v1910 = vrot.slane %v1160, 5
      %v1911 = vrot.slane %v1910, 4
      %v1912 = vrot.slane %v1161, 5
      %v1913 = vsel %vm897, %v1911, %v1912
      %v1914 = vrot.slane %v1912, 4
      %v1915 = vrot.slane %v1162, 5
      %v1916 = vsel %vm897, %v1914, %v1915
      %v1917 = vrot.slane %v1163, 5
      %v1918 = vrot.slane %v1917, 4
      %v1919 = vrot.slane %v1164, 5
      %v1920 = vsel %vm897, %v1918, %v1919
      %v1921 = vrot.slane %v1919, 4
      %v1922 = vrot.slane %v1165, 5
      %v1923 = vsel %vm897, %v1921, %v1922
      %v1924 = vrot.slane %v1166, 5
      %v1925 = vrot.slane %v1924, 4
      %v1926 = vrot.slane %v1167, 5
      %v1927 = vsel %vm897, %v1925, %v1926
      %v1928 = vrot.slane %v1926, 4
      %v1929 = vrot.slane %v1168, 5
      %v1930 = vsel %vm897, %v1928, %v1929
      %v1931 = vrot.slane %v1169, 5
      %v1932 = vrot.slane %v1931, 4
      %v1933 = vrot.slane %v1170, 5
      %v1934 = vsel %vm897, %v1932, %v1933
      %v1935 = vrot.slane %v1933, 4
      %v1936 = vrot.slane %v1171, 5
      %v1937 = vsel %vm897, %v1935, %v1936
      %v1938 = vrot.slane %v1172, 5
      %v1939 = vrot.slane %v1938, 4
      %v1940 = vrot.slane %v1173, 5
      %v1941 = vsel %vm897, %v1939, %v1940
      %v1942 = vrot.slane %v1940, 4
      %v1943 = vrot.slane %v1174, 5
      %v1944 = vsel %vm897, %v1942, %v1943
      %v1945 = vunpack.c.l.b16 %v1836
      %v1946 = vunpack.c.l.b16 %v1839
      %v1947 = vunpack.c.l.b16 %v1843
      %v1948 = vunpack.c.l.b16 %v1846
      %v1949 = vunpack.c.l.b16 %v1850
      %v1950 = vunpack.c.l.b16 %v1853
      %v1951 = vunpack.c.l.b16 %v1857
      %v1952 = vunpack.c.l.b16 %v1860
      %v1953 = vunpack.c.l.b16 %v1864
      %v1954 = vunpack.c.l.b16 %v1867
      %v1955 = vunpack.c.l.b16 %v1871
      %v1956 = vunpack.c.l.b16 %v1874
      %v1957 = vunpack.c.l.b16 %v1878
      %v1958 = vunpack.c.l.b16 %v1881
      %v1959 = vunpack.c.l.b16 %v1885
      %v1960 = vunpack.c.l.b16 %v1888
      %v1961 = vunpack.c.l.b16 %v1892
      %v1962 = vunpack.c.l.b16 %v1895
      %v1963 = vunpack.c.l.b16 %v1899
      %v1964 = vunpack.c.l.b16 %v1902
      %v1965 = vunpack.c.l.b16 %v1906
      %v1966 = vunpack.c.l.b16 %v1909
      %v1967 = vunpack.c.l.b16 %v1913
      %v1968 = vunpack.c.l.b16 %v1916
      %v1969 = vunpack.c.l.b16 %v1920
      %v1970 = vunpack.c.l.b16 %v1923
      %v1971 = vunpack.c.l.b16 %v1927
      %v1972 = vunpack.c.l.b16 %v1930
      %v1973 = vunpack.c.l.b16 %v1934
      %v1974 = vunpack.c.l.b16 %v1937
      %v1975 = vunpack.c.l.b16 %v1941
      %v1976 = vunpack.c.l.b16 %v1944
      %v1977 = vpack.c.b16 %v1946, %v1945
      %v1978 = vpack.c.b16 %v1948, %v1947
      %v1979 = vpack.c.b16 %v1950, %v1949
      %v1980 = vpack.c.b16 %v1952, %v1951
      %v1981 = vpack.c.b16 %v1954, %v1953
      %v1982 = vpack.c.b16 %v1956, %v1955
      %v1983 = vpack.c.b16 %v1958, %v1957
      %v1984 = vpack.c.b16 %v1960, %v1959
      %v1985 = vpack.c.b16 %v1962, %v1961
      %v1986 = vpack.c.b16 %v1964, %v1963
      %v1987 = vpack.c.b16 %v1966, %v1965
      %v1988 = vpack.c.b16 %v1968, %v1967
      %v1989 = vpack.c.b16 %v1970, %v1969
      %v1990 = vpack.c.b16 %v1972, %v1971
      %v1991 = vpack.c.b16 %v1974, %v1973
      %v1992 = vpack.c.b16 %v1976, %v1975
      %1993 = vrot.lane.b32.xlu0 %v1977, 20
      %v1994 = vpop.permute.xlu0 %1993
      %1995 = vrot.lane.b32.xlu0 %v1978, 20
      %v1996 = vpop.permute.xlu0 %1995
      %1997 = vrot.lane.b32.xlu0 %v1979, 20
      %v1998 = vpop.permute.xlu0 %1997
      %1999 = vrot.lane.b32.xlu0 %v1980, 20
      %v2000 = vpop.permute.xlu0 %1999
      %2001 = vrot.lane.b32.xlu0 %v1981, 20
      %v2002 = vpop.permute.xlu0 %2001
      %2003 = vrot.lane.b32.xlu0 %v1982, 20
      %v2004 = vpop.permute.xlu0 %2003
      %2005 = vrot.lane.b32.xlu0 %v1983, 20
      %v2006 = vpop.permute.xlu0 %2005
      %2007 = vrot.lane.b32.xlu0 %v1984, 20
      %v2008 = vpop.permute.xlu0 %2007
      %2009 = vrot.lane.b32.xlu0 %v1985, 20
      %v2010 = vpop.permute.xlu0 %2009
      %2011 = vrot.lane.b32.xlu0 %v1986, 20
      %v2012 = vpop.permute.xlu0 %2011
      %2013 = vrot.lane.b32.xlu0 %v1987, 20
      %v2014 = vpop.permute.xlu0 %2013
      %2015 = vrot.lane.b32.xlu0 %v1988, 20
      %v2016 = vpop.permute.xlu0 %2015
      %2017 = vrot.lane.b32.xlu0 %v1989, 20
      %v2018 = vpop.permute.xlu0 %2017
      %2019 = vrot.lane.b32.xlu0 %v1990, 20
      %v2020 = vpop.permute.xlu0 %2019
      %2021 = vrot.lane.b32.xlu0 %v1991, 20
      %v2022 = vpop.permute.xlu0 %2021
      %2023 = vrot.lane.b32.xlu0 %v1992, 20
      %v2024 = vpop.permute.xlu0 %2023
      %vm2041 = vcmask 195744
      %2042 = vst.msk [vmem:[#allocation2] sm:$0xff] %vm2041, %v1994
      %2043 = vst.msk [vmem:[#allocation2 + $0x8] sm:$0xff] %vm2041, %v1996
      %2044 = vst.msk [vmem:[#allocation2 + $0x10] sm:$0xff] %vm2041, %v1998
      %2045 = vst.msk [vmem:[#allocation2 + $0x18] sm:$0xff] %vm2041, %v2000
      %2046 = vst.msk [vmem:[#allocation2 + $0x20] sm:$0xff] %vm2041, %v2002
      %2047 = vst.msk [vmem:[#allocation2 + $0x28] sm:$0xff] %vm2041, %v2004
      %2048 = vst.msk [vmem:[#allocation2 + $0x30] sm:$0xff] %vm2041, %v2006
      %2049 = vst.msk [vmem:[#allocation2 + $0x38] sm:$0xff] %vm2041, %v2008
      %2050 = vst.msk [vmem:[#allocation2 + $0x40] sm:$0xff] %vm2041, %v2010
      %2051 = vst.msk [vmem:[#allocation2 + $0x48] sm:$0xff] %vm2041, %v2012
      %2052 = vst.msk [vmem:[#allocation2 + $0x50] sm:$0xff] %vm2041, %v2014
      %2053 = vst.msk [vmem:[#allocation2 + $0x58] sm:$0xff] %vm2041, %v2016
      %2054 = vst.msk [vmem:[#allocation2 + $0x60] sm:$0xff] %vm2041, %v2018
      %2055 = vst.msk [vmem:[#allocation2 + $0x68] sm:$0xff] %vm2041, %v2020
      %2056 = vst.msk [vmem:[#allocation2 + $0x70] sm:$0xff] %vm2041, %v2022
      %2057 = vst.msk [vmem:[#allocation2 + $0x78] sm:$0xff] %vm2041, %v2024
      %s2058 = sadd.s32 %s214, 2
      %s2059 = smul.u32 %s2058, 3
      %s2060 = smul.addr %s2059, 4
      %s2061 = scalar_lea.vmem %s195, %s2060
      %v2062 = vld [vmem:[%s2061] sm:$0xf]
      %v2063 = vld [vmem:[%s2061 + $0x4] sm:$0xf]
      %v2064 = vld [vmem:[%s2061 + $0x8] sm:$0x1]
      %v2065 = vld [vmem:[%s2061 + $0xc] sm:$0xf]
      %v2066 = vld [vmem:[%s2061 + $0x10] sm:$0xf]
      %v2067 = vld [vmem:[%s2061 + $0x14] sm:$0x1]
      %v2068 = vld [vmem:[%s2061 + $0x18] sm:$0xf]
      %v2069 = vld [vmem:[%s2061 + $0x1c] sm:$0xf]
      %v2070 = vld [vmem:[%s2061 + $0x20] sm:$0x1]
      %v2071 = vld [vmem:[%s2061 + $0x24] sm:$0xf]
      %v2072 = vld [vmem:[%s2061 + $0x28] sm:$0xf]
      %v2073 = vld [vmem:[%s2061 + $0x2c] sm:$0x1]
      %v2074 = vld [vmem:[%s2061 + $0x30] sm:$0xf]
      %v2075 = vld [vmem:[%s2061 + $0x34] sm:$0xf]
      %v2076 = vld [vmem:[%s2061 + $0x38] sm:$0x1]
      %v2077 = vld [vmem:[%s2061 + $0x3c] sm:$0xf]
      %v2078 = vld [vmem:[%s2061 + $0x40] sm:$0xf]
      %v2079 = vld [vmem:[%s2061 + $0x44] sm:$0x1]
      %v2080 = vld [vmem:[%s2061 + $0x48] sm:$0xf]
      %v2081 = vld [vmem:[%s2061 + $0x4c] sm:$0xf]
      %v2082 = vld [vmem:[%s2061 + $0x50] sm:$0x1]
      %v2083 = vld [vmem:[%s2061 + $0x54] sm:$0xf]
      %v2084 = vld [vmem:[%s2061 + $0x58] sm:$0xf]
      %v2085 = vld [vmem:[%s2061 + $0x5c] sm:$0x1]
      %v2086 = vld [vmem:[%s2061 + $0x60] sm:$0xf]
      %v2087 = vld [vmem:[%s2061 + $0x64] sm:$0xf]
      %v2088 = vld [vmem:[%s2061 + $0x68] sm:$0x1]
      %v2089 = vld [vmem:[%s2061 + $0x6c] sm:$0xf]
      %v2090 = vld [vmem:[%s2061 + $0x70] sm:$0xf]
      %v2091 = vld [vmem:[%s2061 + $0x74] sm:$0x1]
      %v2092 = vld [vmem:[%s2061 + $0x78] sm:$0xf]
      %v2093 = vld [vmem:[%s2061 + $0x7c] sm:$0xf]
      %v2094 = vld [vmem:[%s2061 + $0x80] sm:$0x1]
      %v2095 = vld [vmem:[%s2061 + $0x84] sm:$0xf]
      %v2096 = vld [vmem:[%s2061 + $0x88] sm:$0xf]
      %v2097 = vld [vmem:[%s2061 + $0x8c] sm:$0x1]
      %v2098 = vld [vmem:[%s2061 + $0x90] sm:$0xf]
      %v2099 = vld [vmem:[%s2061 + $0x94] sm:$0xf]
      %v2100 = vld [vmem:[%s2061 + $0x98] sm:$0x1]
      %v2101 = vld [vmem:[%s2061 + $0x9c] sm:$0xf]
      %v2102 = vld [vmem:[%s2061 + $0xa0] sm:$0xf]
      %v2103 = vld [vmem:[%s2061 + $0xa4] sm:$0x1]
      %v2104 = vld [vmem:[%s2061 + $0xa8] sm:$0xf]
      %v2105 = vld [vmem:[%s2061 + $0xac] sm:$0xf]
      %v2106 = vld [vmem:[%s2061 + $0xb0] sm:$0x1]
      %v2107 = vld [vmem:[%s2061 + $0xb4] sm:$0xf]
      %v2108 = vld [vmem:[%s2061 + $0xb8] sm:$0xf]
      %v2109 = vld [vmem:[%s2061 + $0xbc] sm:$0x1]
      %v2142 = vunpack.c.l.b16 %v2062
      %v2143 = vunpack.c.l.b16 %v2063
      %v2144 = vunpack.c.l.b16 %v2065
      %v2145 = vunpack.c.l.b16 %v2066
      %v2146 = vunpack.c.l.b16 %v2068
      %v2147 = vunpack.c.l.b16 %v2069
      %v2148 = vunpack.c.l.b16 %v2071
      %v2149 = vunpack.c.l.b16 %v2072
      %v2150 = vunpack.c.l.b16 %v2074
      %v2151 = vunpack.c.l.b16 %v2075
      %v2152 = vunpack.c.l.b16 %v2077
      %v2153 = vunpack.c.l.b16 %v2078
      %v2154 = vunpack.c.l.b16 %v2080
      %v2155 = vunpack.c.l.b16 %v2081
      %v2156 = vunpack.c.l.b16 %v2083
      %v2157 = vunpack.c.l.b16 %v2084
      %v2158 = vunpack.c.l.b16 %v2086
      %v2159 = vunpack.c.l.b16 %v2087
      %v2160 = vunpack.c.l.b16 %v2089
      %v2161 = vunpack.c.l.b16 %v2090
      %v2162 = vunpack.c.l.b16 %v2092
      %v2163 = vunpack.c.l.b16 %v2093
      %v2164 = vunpack.c.l.b16 %v2095
      %v2165 = vunpack.c.l.b16 %v2096
      %v2166 = vunpack.c.l.b16 %v2098
      %v2167 = vunpack.c.l.b16 %v2099
      %v2168 = vunpack.c.l.b16 %v2101
      %v2169 = vunpack.c.l.b16 %v2102
      %v2170 = vunpack.c.l.b16 %v2104
      %v2171 = vunpack.c.l.b16 %v2105
      %v2172 = vunpack.c.l.b16 %v2107
      %v2173 = vunpack.c.l.b16 %v2108
      %v2174 = vpack.c.b16 %v2143, %v2142
      %v2175 = vpack.c.b16 %v2145, %v2144
      %v2176 = vpack.c.b16 %v2147, %v2146
      %v2177 = vpack.c.b16 %v2149, %v2148
      %v2178 = vpack.c.b16 %v2151, %v2150
      %v2179 = vpack.c.b16 %v2153, %v2152
      %v2180 = vpack.c.b16 %v2155, %v2154
      %v2181 = vpack.c.b16 %v2157, %v2156
      %v2182 = vpack.c.b16 %v2159, %v2158
      %v2183 = vpack.c.b16 %v2161, %v2160
      %v2184 = vpack.c.b16 %v2163, %v2162
      %v2185 = vpack.c.b16 %v2165, %v2164
      %v2186 = vpack.c.b16 %v2167, %v2166
      %v2187 = vpack.c.b16 %v2169, %v2168
      %v2188 = vpack.c.b16 %v2171, %v2170
      %v2189 = vpack.c.b16 %v2173, %v2172
      %2190 = vrot.lane.b32.xlu0 %v2174, 24
      %v2191 = vpop.permute.xlu0 %2190
      %2192 = vrot.lane.b32.xlu0 %v2175, 24
      %v2193 = vpop.permute.xlu0 %2192
      %2194 = vrot.lane.b32.xlu0 %v2176, 24
      %v2195 = vpop.permute.xlu0 %2194
      %2196 = vrot.lane.b32.xlu0 %v2177, 24
      %v2197 = vpop.permute.xlu0 %2196
      %2198 = vrot.lane.b32.xlu0 %v2178, 24
      %v2199 = vpop.permute.xlu0 %2198
      %2200 = vrot.lane.b32.xlu0 %v2179, 24
      %v2201 = vpop.permute.xlu0 %2200
      %2202 = vrot.lane.b32.xlu0 %v2180, 24
      %v2203 = vpop.permute.xlu0 %2202
      %2204 = vrot.lane.b32.xlu0 %v2181, 24
      %v2205 = vpop.permute.xlu0 %2204
      %2206 = vrot.lane.b32.xlu0 %v2182, 24
      %v2207 = vpop.permute.xlu0 %2206
      %2208 = vrot.lane.b32.xlu0 %v2183, 24
      %v2209 = vpop.permute.xlu0 %2208
      %2210 = vrot.lane.b32.xlu0 %v2184, 24
      %v2211 = vpop.permute.xlu0 %2210
      %2212 = vrot.lane.b32.xlu0 %v2185, 24
      %v2213 = vpop.permute.xlu0 %2212
      %2214 = vrot.lane.b32.xlu0 %v2186, 24
      %v2215 = vpop.permute.xlu0 %2214
      %2216 = vrot.lane.b32.xlu0 %v2187, 24
      %v2217 = vpop.permute.xlu0 %2216
      %2218 = vrot.lane.b32.xlu0 %v2188, 24
      %v2219 = vpop.permute.xlu0 %2218
      %2220 = vrot.lane.b32.xlu0 %v2189, 24
      %v2221 = vpop.permute.xlu0 %2220
      %vm2238 = vcmask 228544
      %2239 = vst.msk [vmem:[#allocation2] sm:$0xff] %vm2238, %v2191
      %2240 = vst.msk [vmem:[#allocation2 + $0x8] sm:$0xff] %vm2238, %v2193
      %2241 = vst.msk [vmem:[#allocation2 + $0x10] sm:$0xff] %vm2238, %v2195
      %2242 = vst.msk [vmem:[#allocation2 + $0x18] sm:$0xff] %vm2238, %v2197
      %2243 = vst.msk [vmem:[#allocation2 + $0x20] sm:$0xff] %vm2238, %v2199
      %2244 = vst.msk [vmem:[#allocation2 + $0x28] sm:$0xff] %vm2238, %v2201
      %2245 = vst.msk [vmem:[#allocation2 + $0x30] sm:$0xff] %vm2238, %v2203
      %2246 = vst.msk [vmem:[#allocation2 + $0x38] sm:$0xff] %vm2238, %v2205
      %2247 = vst.msk [vmem:[#allocation2 + $0x40] sm:$0xff] %vm2238, %v2207
      %2248 = vst.msk [vmem:[#allocation2 + $0x48] sm:$0xff] %vm2238, %v2209
      %2249 = vst.msk [vmem:[#allocation2 + $0x50] sm:$0xff] %vm2238, %v2211
      %2250 = vst.msk [vmem:[#allocation2 + $0x58] sm:$0xff] %vm2238, %v2213
      %2251 = vst.msk [vmem:[#allocation2 + $0x60] sm:$0xff] %vm2238, %v2215
      %2252 = vst.msk [vmem:[#allocation2 + $0x68] sm:$0xff] %vm2238, %v2217
      %2253 = vst.msk [vmem:[#allocation2 + $0x70] sm:$0xff] %vm2238, %v2219
      %2254 = vst.msk [vmem:[#allocation2 + $0x78] sm:$0xff] %vm2238, %v2221
      %v2256 = vshrl.u32 %v2062, 16
      %v2258 = vrot.slane %v2256, 4
      %v2259 = vshll.u32 %v2062, 16
      %v2261 = vrot.slane %v2259, 5
      %v2262 = vor.u32 %v2258, %v2261
      %v2263 = vrot.slane %v2262, 4
      %v2265 = vshll.u32 %v2063, 16
      %v2267 = vrot.slane %v2265, 5
      %v2268 = vsel %vm381, %v2263, %v2267
      %v2269 = vshrl.u32 %v2063, 16
      %v2271 = vrot.slane %v2269, 4
      %v2272 = vor.u32 %v2271, %v2267
      %v2273 = vrot.slane %v2272, 4
      %v2275 = vshll.u32 %v2064, 16
      %v2277 = vrot.slane %v2275, 5
      %v2278 = vsel %vm381, %v2273, %v2277
      %v2280 = vshrl.u32 %v2065, 16
      %v2282 = vrot.slane %v2280, 4
      %v2283 = vshll.u32 %v2065, 16
      %v2285 = vrot.slane %v2283, 5
      %v2286 = vor.u32 %v2282, %v2285
      %v2287 = vrot.slane %v2286, 4
      %v2289 = vshll.u32 %v2066, 16
      %v2291 = vrot.slane %v2289, 5
      %v2292 = vsel %vm381, %v2287, %v2291
      %v2293 = vshrl.u32 %v2066, 16
      %v2295 = vrot.slane %v2293, 4
      %v2296 = vor.u32 %v2295, %v2291
      %v2297 = vrot.slane %v2296, 4
      %v2299 = vshll.u32 %v2067, 16
      %v2301 = vrot.slane %v2299, 5
      %v2302 = vsel %vm381, %v2297, %v2301
      %v2304 = vshrl.u32 %v2068, 16
      %v2306 = vrot.slane %v2304, 4
      %v2307 = vshll.u32 %v2068, 16
      %v2309 = vrot.slane %v2307, 5
      %v2310 = vor.u32 %v2306, %v2309
      %v2311 = vrot.slane %v2310, 4
      %v2313 = vshll.u32 %v2069, 16
      %v2315 = vrot.slane %v2313, 5
      %v2316 = vsel %vm381, %v2311, %v2315
      %v2317 = vshrl.u32 %v2069, 16
      %v2319 = vrot.slane %v2317, 4
      %v2320 = vor.u32 %v2319, %v2315
      %v2321 = vrot.slane %v2320, 4
      %v2323 = vshll.u32 %v2070, 16
      %v2325 = vrot.slane %v2323, 5
      %v2326 = vsel %vm381, %v2321, %v2325
      %v2328 = vshrl.u32 %v2071, 16
      %v2330 = vrot.slane %v2328, 4
      %v2331 = vshll.u32 %v2071, 16
      %v2333 = vrot.slane %v2331, 5
      %v2334 = vor.u32 %v2330, %v2333
      %v2335 = vrot.slane %v2334, 4
      %v2337 = vshll.u32 %v2072, 16
      %v2339 = vrot.slane %v2337, 5
      %v2340 = vsel %vm381, %v2335, %v2339
      %v2341 = vshrl.u32 %v2072, 16
      %v2343 = vrot.slane %v2341, 4
      %v2344 = vor.u32 %v2343, %v2339
      %v2345 = vrot.slane %v2344, 4
      %v2347 = vshll.u32 %v2073, 16
      %v2349 = vrot.slane %v2347, 5
      %v2350 = vsel %vm381, %v2345, %v2349
      %v2352 = vshrl.u32 %v2074, 16
      %v2354 = vrot.slane %v2352, 4
      %v2355 = vshll.u32 %v2074, 16
      %v2357 = vrot.slane %v2355, 5
      %v2358 = vor.u32 %v2354, %v2357
      %v2359 = vrot.slane %v2358, 4
      %v2361 = vshll.u32 %v2075, 16
      %v2363 = vrot.slane %v2361, 5
      %v2364 = vsel %vm381, %v2359, %v2363
      %v2365 = vshrl.u32 %v2075, 16
      %v2367 = vrot.slane %v2365, 4
      %v2368 = vor.u32 %v2367, %v2363
      %v2369 = vrot.slane %v2368, 4
      %v2371 = vshll.u32 %v2076, 16
      %v2373 = vrot.slane %v2371, 5
      %v2374 = vsel %vm381, %v2369, %v2373
      %v2376 = vshrl.u32 %v2077, 16
      %v2378 = vrot.slane %v2376, 4
      %v2379 = vshll.u32 %v2077, 16
      %v2381 = vrot.slane %v2379, 5
      %v2382 = vor.u32 %v2378, %v2381
      %v2383 = vrot.slane %v2382, 4
      %v2385 = vshll.u32 %v2078, 16
      %v2387 = vrot.slane %v2385, 5
      %v2388 = vsel %vm381, %v2383, %v2387
      %v2389 = vshrl.u32 %v2078, 16
      %v2391 = vrot.slane %v2389, 4
      %v2392 = vor.u32 %v2391, %v2387
      %v2393 = vrot.slane %v2392, 4
      %v2395 = vshll.u32 %v2079, 16
      %v2397 = vrot.slane %v2395, 5
      %v2398 = vsel %vm381, %v2393, %v2397
      %v2400 = vshrl.u32 %v2080, 16
      %v2402 = vrot.slane %v2400, 4
      %v2403 = vshll.u32 %v2080, 16
      %v2405 = vrot.slane %v2403, 5
      %v2406 = vor.u32 %v2402, %v2405
      %v2407 = vrot.slane %v2406, 4
      %v2409 = vshll.u32 %v2081, 16
      %v2411 = vrot.slane %v2409, 5
      %v2412 = vsel %vm381, %v2407, %v2411
      %v2413 = vshrl.u32 %v2081, 16
      %v2415 = vrot.slane %v2413, 4
      %v2416 = vor.u32 %v2415, %v2411
      %v2417 = vrot.slane %v2416, 4
      %v2419 = vshll.u32 %v2082, 16
      %v2421 = vrot.slane %v2419, 5
      %v2422 = vsel %vm381, %v2417, %v2421
      %v2424 = vshrl.u32 %v2083, 16
      %v2426 = vrot.slane %v2424, 4
      %v2427 = vshll.u32 %v2083, 16
      %v2429 = vrot.slane %v2427, 5
      %v2430 = vor.u32 %v2426, %v2429
      %v2431 = vrot.slane %v2430, 4
      %v2433 = vshll.u32 %v2084, 16
      %v2435 = vrot.slane %v2433, 5
      %v2436 = vsel %vm381, %v2431, %v2435
      %v2437 = vshrl.u32 %v2084, 16
      %v2439 = vrot.slane %v2437, 4
      %v2440 = vor.u32 %v2439, %v2435
      %v2441 = vrot.slane %v2440, 4
      %v2443 = vshll.u32 %v2085, 16
      %v2445 = vrot.slane %v2443, 5
      %v2446 = vsel %vm381, %v2441, %v2445
      %v2448 = vshrl.u32 %v2086, 16
      %v2450 = vrot.slane %v2448, 4
      %v2451 = vshll.u32 %v2086, 16
      %v2453 = vrot.slane %v2451, 5
      %v2454 = vor.u32 %v2450, %v2453
      %v2455 = vrot.slane %v2454, 4
      %v2457 = vshll.u32 %v2087, 16
      %v2459 = vrot.slane %v2457, 5
      %v2460 = vsel %vm381, %v2455, %v2459
      %v2461 = vshrl.u32 %v2087, 16
      %v2463 = vrot.slane %v2461, 4
      %v2464 = vor.u32 %v2463, %v2459
      %v2465 = vrot.slane %v2464, 4
      %v2467 = vshll.u32 %v2088, 16
      %v2469 = vrot.slane %v2467, 5
      %v2470 = vsel %vm381, %v2465, %v2469
      %v2472 = vshrl.u32 %v2089, 16
      %v2474 = vrot.slane %v2472, 4
      %v2475 = vshll.u32 %v2089, 16
      %v2477 = vrot.slane %v2475, 5
      %v2478 = vor.u32 %v2474, %v2477
      %v2479 = vrot.slane %v2478, 4
      %v2481 = vshll.u32 %v2090, 16
      %v2483 = vrot.slane %v2481, 5
      %v2484 = vsel %vm381, %v2479, %v2483
      %v2485 = vshrl.u32 %v2090, 16
      %v2487 = vrot.slane %v2485, 4
      %v2488 = vor.u32 %v2487, %v2483
      %v2489 = vrot.slane %v2488, 4
      %v2491 = vshll.u32 %v2091, 16
      %v2493 = vrot.slane %v2491, 5
      %v2494 = vsel %vm381, %v2489, %v2493
      %v2496 = vshrl.u32 %v2092, 16
      %v2498 = vrot.slane %v2496, 4
      %v2499 = vshll.u32 %v2092, 16
      %v2501 = vrot.slane %v2499, 5
      %v2502 = vor.u32 %v2498, %v2501
      %v2503 = vrot.slane %v2502, 4
      %v2505 = vshll.u32 %v2093, 16
      %v2507 = vrot.slane %v2505, 5
      %v2508 = vsel %vm381, %v2503, %v2507
      %v2509 = vshrl.u32 %v2093, 16
      %v2511 = vrot.slane %v2509, 4
      %v2512 = vor.u32 %v2511, %v2507
      %v2513 = vrot.slane %v2512, 4
      %v2515 = vshll.u32 %v2094, 16
      %v2517 = vrot.slane %v2515, 5
      %v2518 = vsel %vm381, %v2513, %v2517
      %v2520 = vshrl.u32 %v2095, 16
      %v2522 = vrot.slane %v2520, 4
      %v2523 = vshll.u32 %v2095, 16
      %v2525 = vrot.slane %v2523, 5
      %v2526 = vor.u32 %v2522, %v2525
      %v2527 = vrot.slane %v2526, 4
      %v2529 = vshll.u32 %v2096, 16
      %v2531 = vrot.slane %v2529, 5
      %v2532 = vsel %vm381, %v2527, %v2531
      %v2533 = vshrl.u32 %v2096, 16
      %v2535 = vrot.slane %v2533, 4
      %v2536 = vor.u32 %v2535, %v2531
      %v2537 = vrot.slane %v2536, 4
      %v2539 = vshll.u32 %v2097, 16
      %v2541 = vrot.slane %v2539, 5
      %v2542 = vsel %vm381, %v2537, %v2541
      %v2544 = vshrl.u32 %v2098, 16
      %v2546 = vrot.slane %v2544, 4
      %v2547 = vshll.u32 %v2098, 16
      %v2549 = vrot.slane %v2547, 5
      %v2550 = vor.u32 %v2546, %v2549
      %v2551 = vrot.slane %v2550, 4
      %v2553 = vshll.u32 %v2099, 16
      %v2555 = vrot.slane %v2553, 5
      %v2556 = vsel %vm381, %v2551, %v2555
      %v2557 = vshrl.u32 %v2099, 16
      %v2559 = vrot.slane %v2557, 4
      %v2560 = vor.u32 %v2559, %v2555
      %v2561 = vrot.slane %v2560, 4
      %v2563 = vshll.u32 %v2100, 16
      %v2565 = vrot.slane %v2563, 5
      %v2566 = vsel %vm381, %v2561, %v2565
      %v2568 = vshrl.u32 %v2101, 16
      %v2570 = vrot.slane %v2568, 4
      %v2571 = vshll.u32 %v2101, 16
      %v2573 = vrot.slane %v2571, 5
      %v2574 = vor.u32 %v2570, %v2573
      %v2575 = vrot.slane %v2574, 4
      %v2577 = vshll.u32 %v2102, 16
      %v2579 = vrot.slane %v2577, 5
      %v2580 = vsel %vm381, %v2575, %v2579
      %v2581 = vshrl.u32 %v2102, 16
      %v2583 = vrot.slane %v2581, 4
      %v2584 = vor.u32 %v2583, %v2579
      %v2585 = vrot.slane %v2584, 4
      %v2587 = vshll.u32 %v2103, 16
      %v2589 = vrot.slane %v2587, 5
      %v2590 = vsel %vm381, %v2585, %v2589
      %v2592 = vshrl.u32 %v2104, 16
      %v2594 = vrot.slane %v2592, 4
      %v2595 = vshll.u32 %v2104, 16
      %v2597 = vrot.slane %v2595, 5
      %v2598 = vor.u32 %v2594, %v2597
      %v2599 = vrot.slane %v2598, 4
      %v2601 = vshll.u32 %v2105, 16
      %v2603 = vrot.slane %v2601, 5
      %v2604 = vsel %vm381, %v2599, %v2603
      %v2605 = vshrl.u32 %v2105, 16
      %v2607 = vrot.slane %v2605, 4
      %v2608 = vor.u32 %v2607, %v2603
      %v2609 = vrot.slane %v2608, 4
      %v2611 = vshll.u32 %v2106, 16
      %v2613 = vrot.slane %v2611, 5
      %v2614 = vsel %vm381, %v2609, %v2613
      %v2616 = vshrl.u32 %v2107, 16
      %v2618 = vrot.slane %v2616, 4
      %v2619 = vshll.u32 %v2107, 16
      %v2621 = vrot.slane %v2619, 5
      %v2622 = vor.u32 %v2618, %v2621
      %v2623 = vrot.slane %v2622, 4
      %v2625 = vshll.u32 %v2108, 16
      %v2627 = vrot.slane %v2625, 5
      %v2628 = vsel %vm381, %v2623, %v2627
      %v2629 = vshrl.u32 %v2108, 16
      %v2631 = vrot.slane %v2629, 4
      %v2632 = vor.u32 %v2631, %v2627
      %v2633 = vrot.slane %v2632, 4
      %v2635 = vshll.u32 %v2109, 16
      %v2637 = vrot.slane %v2635, 5
      %v2638 = vsel %vm381, %v2633, %v2637
      %v2639 = vunpack.c.l.b16 %v2268
      %v2640 = vunpack.c.l.b16 %v2278
      %v2641 = vunpack.c.l.b16 %v2292
      %v2642 = vunpack.c.l.b16 %v2302
      %v2643 = vunpack.c.l.b16 %v2316
      %v2644 = vunpack.c.l.b16 %v2326
      %v2645 = vunpack.c.l.b16 %v2340
      %v2646 = vunpack.c.l.b16 %v2350
      %v2647 = vunpack.c.l.b16 %v2364
      %v2648 = vunpack.c.l.b16 %v2374
      %v2649 = vunpack.c.l.b16 %v2388
      %v2650 = vunpack.c.l.b16 %v2398
      %v2651 = vunpack.c.l.b16 %v2412
      %v2652 = vunpack.c.l.b16 %v2422
      %v2653 = vunpack.c.l.b16 %v2436
      %v2654 = vunpack.c.l.b16 %v2446
      %v2655 = vunpack.c.l.b16 %v2460
      %v2656 = vunpack.c.l.b16 %v2470
      %v2657 = vunpack.c.l.b16 %v2484
      %v2658 = vunpack.c.l.b16 %v2494
      %v2659 = vunpack.c.l.b16 %v2508
      %v2660 = vunpack.c.l.b16 %v2518
      %v2661 = vunpack.c.l.b16 %v2532
      %v2662 = vunpack.c.l.b16 %v2542
      %v2663 = vunpack.c.l.b16 %v2556
      %v2664 = vunpack.c.l.b16 %v2566
      %v2665 = vunpack.c.l.b16 %v2580
      %v2666 = vunpack.c.l.b16 %v2590
      %v2667 = vunpack.c.l.b16 %v2604
      %v2668 = vunpack.c.l.b16 %v2614
      %v2669 = vunpack.c.l.b16 %v2628
      %v2670 = vunpack.c.l.b16 %v2638
      %v2671 = vpack.c.b16 %v2640, %v2639
      %v2672 = vpack.c.b16 %v2642, %v2641
      %v2673 = vpack.c.b16 %v2644, %v2643
      %v2674 = vpack.c.b16 %v2646, %v2645
      %v2675 = vpack.c.b16 %v2648, %v2647
      %v2676 = vpack.c.b16 %v2650, %v2649
      %v2677 = vpack.c.b16 %v2652, %v2651
      %v2678 = vpack.c.b16 %v2654, %v2653
      %v2679 = vpack.c.b16 %v2656, %v2655
      %v2680 = vpack.c.b16 %v2658, %v2657
      %v2681 = vpack.c.b16 %v2660, %v2659
      %v2682 = vpack.c.b16 %v2662, %v2661
      %v2683 = vpack.c.b16 %v2664, %v2663
      %v2684 = vpack.c.b16 %v2666, %v2665
      %v2685 = vpack.c.b16 %v2668, %v2667
      %v2686 = vpack.c.b16 %v2670, %v2669
      %2687 = vrot.lane.b32.xlu0 %v2671, 28
      %v2688 = vpop.permute.xlu0 %2687
      %2689 = vrot.lane.b32.xlu0 %v2672, 28
      %v2690 = vpop.permute.xlu0 %2689
      %2691 = vrot.lane.b32.xlu0 %v2673, 28
      %v2692 = vpop.permute.xlu0 %2691
      %2693 = vrot.lane.b32.xlu0 %v2674, 28
      %v2694 = vpop.permute.xlu0 %2693
      %2695 = vrot.lane.b32.xlu0 %v2675, 28
      %v2696 = vpop.permute.xlu0 %2695
      %2697 = vrot.lane.b32.xlu0 %v2676, 28
      %v2698 = vpop.permute.xlu0 %2697
      %2699 = vrot.lane.b32.xlu0 %v2677, 28
      %v2700 = vpop.permute.xlu0 %2699
      %2701 = vrot.lane.b32.xlu0 %v2678, 28
      %v2702 = vpop.permute.xlu0 %2701
      %2703 = vrot.lane.b32.xlu0 %v2679, 28
      %v2704 = vpop.permute.xlu0 %2703
      %2705 = vrot.lane.b32.xlu0 %v2680, 28
      %v2706 = vpop.permute.xlu0 %2705
      %2707 = vrot.lane.b32.xlu0 %v2681, 28
      %v2708 = vpop.permute.xlu0 %2707
      %2709 = vrot.lane.b32.xlu0 %v2682, 28
      %v2710 = vpop.permute.xlu0 %2709
      %2711 = vrot.lane.b32.xlu0 %v2683, 28
      %v2712 = vpop.permute.xlu0 %2711
      %2713 = vrot.lane.b32.xlu0 %v2684, 28
      %v2714 = vpop.permute.xlu0 %2713
      %2715 = vrot.lane.b32.xlu0 %v2685, 28
      %v2716 = vpop.permute.xlu0 %2715
      %2717 = vrot.lane.b32.xlu0 %v2686, 28
      %v2718 = vpop.permute.xlu0 %2717
      %vm2735 = vcmask 261344
      %2736 = vst.msk [vmem:[#allocation2] sm:$0xff] %vm2735, %v2688
      %2737 = vst.msk [vmem:[#allocation2 + $0x8] sm:$0xff] %vm2735, %v2690
      %2738 = vst.msk [vmem:[#allocation2 + $0x10] sm:$0xff] %vm2735, %v2692
      %2739 = vst.msk [vmem:[#allocation2 + $0x18] sm:$0xff] %vm2735, %v2694
      %2740 = vst.msk [vmem:[#allocation2 + $0x20] sm:$0xff] %vm2735, %v2696
      %2741 = vst.msk [vmem:[#allocation2 + $0x28] sm:$0xff] %vm2735, %v2698
      %2742 = vst.msk [vmem:[#allocation2 + $0x30] sm:$0xff] %vm2735, %v2700
      %2743 = vst.msk [vmem:[#allocation2 + $0x38] sm:$0xff] %vm2735, %v2702
      %2744 = vst.msk [vmem:[#allocation2 + $0x40] sm:$0xff] %vm2735, %v2704
      %2745 = vst.msk [vmem:[#allocation2 + $0x48] sm:$0xff] %vm2735, %v2706
      %2746 = vst.msk [vmem:[#allocation2 + $0x50] sm:$0xff] %vm2735, %v2708
      %2747 = vst.msk [vmem:[#allocation2 + $0x58] sm:$0xff] %vm2735, %v2710
      %2748 = vst.msk [vmem:[#allocation2 + $0x60] sm:$0xff] %vm2735, %v2712
      %2749 = vst.msk [vmem:[#allocation2 + $0x68] sm:$0xff] %vm2735, %v2714
      %2750 = vst.msk [vmem:[#allocation2 + $0x70] sm:$0xff] %vm2735, %v2716
      %2751 = vst.msk [vmem:[#allocation2 + $0x78] sm:$0xff] %vm2735, %v2718
      %v2768 = vrot.slane %v2062, 5
      %v2769 = vrot.slane %v2768, 4
      %v2770 = vrot.slane %v2063, 5
      %v2771 = vsel %vm897, %v2769, %v2770
      %v2772 = vrot.slane %v2770, 4
      %v2773 = vrot.slane %v2064, 5
      %v2774 = vsel %vm897, %v2772, %v2773
      %v2775 = vrot.slane %v2065, 5
      %v2776 = vrot.slane %v2775, 4
      %v2777 = vrot.slane %v2066, 5
      %v2778 = vsel %vm897, %v2776, %v2777
      %v2779 = vrot.slane %v2777, 4
      %v2780 = vrot.slane %v2067, 5
      %v2781 = vsel %vm897, %v2779, %v2780
      %v2782 = vrot.slane %v2068, 5
      %v2783 = vrot.slane %v2782, 4
      %v2784 = vrot.slane %v2069, 5
      %v2785 = vsel %vm897, %v2783, %v2784
      %v2786 = vrot.slane %v2784, 4
      %v2787 = vrot.slane %v2070, 5
      %v2788 = vsel %vm897, %v2786, %v2787
      %v2789 = vrot.slane %v2071, 5
      %v2790 = vrot.slane %v2789, 4
      %v2791 = vrot.slane %v2072, 5
      %v2792 = vsel %vm897, %v2790, %v2791
      %v2793 = vrot.slane %v2791, 4
      %v2794 = vrot.slane %v2073, 5
      %v2795 = vsel %vm897, %v2793, %v2794
      %v2796 = vrot.slane %v2074, 5
      %v2797 = vrot.slane %v2796, 4
      %v2798 = vrot.slane %v2075, 5
      %v2799 = vsel %vm897, %v2797, %v2798
      %v2800 = vrot.slane %v2798, 4
      %v2801 = vrot.slane %v2076, 5
      %v2802 = vsel %vm897, %v2800, %v2801
      %v2803 = vrot.slane %v2077, 5
      %v2804 = vrot.slane %v2803, 4
      %v2805 = vrot.slane %v2078, 5
      %v2806 = vsel %vm897, %v2804, %v2805
      %v2807 = vrot.slane %v2805, 4
      %v2808 = vrot.slane %v2079, 5
      %v2809 = vsel %vm897, %v2807, %v2808
      %v2810 = vrot.slane %v2080, 5
      %v2811 = vrot.slane %v2810, 4
      %v2812 = vrot.slane %v2081, 5
      %v2813 = vsel %vm897, %v2811, %v2812
      %v2814 = vrot.slane %v2812, 4
      %v2815 = vrot.slane %v2082, 5
      %v2816 = vsel %vm897, %v2814, %v2815
      %v2817 = vrot.slane %v2083, 5
      %v2818 = vrot.slane %v2817, 4
      %v2819 = vrot.slane %v2084, 5
      %v2820 = vsel %vm897, %v2818, %v2819
      %v2821 = vrot.slane %v2819, 4
      %v2822 = vrot.slane %v2085, 5
      %v2823 = vsel %vm897, %v2821, %v2822
      %v2824 = vrot.slane %v2086, 5
      %v2825 = vrot.slane %v2824, 4
      %v2826 = vrot.slane %v2087, 5
      %v2827 = vsel %vm897, %v2825, %v2826
      %v2828 = vrot.slane %v2826, 4
      %v2829 = vrot.slane %v2088, 5
      %v2830 = vsel %vm897, %v2828, %v2829
      %v2831 = vrot.slane %v2089, 5
      %v2832 = vrot.slane %v2831, 4
      %v2833 = vrot.slane %v2090, 5
      %v2834 = vsel %vm897, %v2832, %v2833
      %v2835 = vrot.slane %v2833, 4
      %v2836 = vrot.slane %v2091, 5
      %v2837 = vsel %vm897, %v2835, %v2836
      %v2838 = vrot.slane %v2092, 5
      %v2839 = vrot.slane %v2838, 4
      %v2840 = vrot.slane %v2093, 5
      %v2841 = vsel %vm897, %v2839, %v2840
      %v2842 = vrot.slane %v2840, 4
      %v2843 = vrot.slane %v2094, 5
      %v2844 = vsel %vm897, %v2842, %v2843
      %v2845 = vrot.slane %v2095, 5
      %v2846 = vrot.slane %v2845, 4
      %v2847 = vrot.slane %v2096, 5
      %v2848 = vsel %vm897, %v2846, %v2847
      %v2849 = vrot.slane %v2847, 4
      %v2850 = vrot.slane %v2097, 5
      %v2851 = vsel %vm897, %v2849, %v2850
      %v2852 = vrot.slane %v2098, 5
      %v2853 = vrot.slane %v2852, 4
      %v2854 = vrot.slane %v2099, 5
      %v2855 = vsel %vm897, %v2853, %v2854
      %v2856 = vrot.slane %v2854, 4
      %v2857 = vrot.slane %v2100, 5
      %v2858 = vsel %vm897, %v2856, %v2857
      %v2859 = vrot.slane %v2101, 5
      %v2860 = vrot.slane %v2859, 4
      %v2861 = vrot.slane %v2102, 5
      %v2862 = vsel %vm897, %v2860, %v2861
      %v2863 = vrot.slane %v2861, 4
      %v2864 = vrot.slane %v2103, 5
      %v2865 = vsel %vm897, %v2863, %v2864
      %v2866 = vrot.slane %v2104, 5
      %v2867 = vrot.slane %v2866, 4
      %v2868 = vrot.slane %v2105, 5
      %v2869 = vsel %vm897, %v2867, %v2868
      %v2870 = vrot.slane %v2868, 4
      %v2871 = vrot.slane %v2106, 5
      %v2872 = vsel %vm897, %v2870, %v2871
      %v2873 = vrot.slane %v2107, 5
      %v2874 = vrot.slane %v2873, 4
      %v2875 = vrot.slane %v2108, 5
      %v2876 = vsel %vm897, %v2874, %v2875
      %v2877 = vrot.slane %v2875, 4
      %v2878 = vrot.slane %v2109, 5
      %v2879 = vsel %vm897, %v2877, %v2878
      %v2880 = vunpack.c.l.b16 %v2771
      %v2881 = vunpack.c.l.b16 %v2774
      %v2882 = vunpack.c.l.b16 %v2778
      %v2883 = vunpack.c.l.b16 %v2781
      %v2884 = vunpack.c.l.b16 %v2785
      %v2885 = vunpack.c.l.b16 %v2788
      %v2886 = vunpack.c.l.b16 %v2792
      %v2887 = vunpack.c.l.b16 %v2795
      %v2888 = vunpack.c.l.b16 %v2799
      %v2889 = vunpack.c.l.b16 %v2802
      %v2890 = vunpack.c.l.b16 %v2806
      %v2891 = vunpack.c.l.b16 %v2809
      %v2892 = vunpack.c.l.b16 %v2813
      %v2893 = vunpack.c.l.b16 %v2816
      %v2894 = vunpack.c.l.b16 %v2820
      %v2895 = vunpack.c.l.b16 %v2823
      %v2896 = vunpack.c.l.b16 %v2827
      %v2897 = vunpack.c.l.b16 %v2830
      %v2898 = vunpack.c.l.b16 %v2834
      %v2899 = vunpack.c.l.b16 %v2837
      %v2900 = vunpack.c.l.b16 %v2841
      %v2901 = vunpack.c.l.b16 %v2844
      %v2902 = vunpack.c.l.b16 %v2848
      %v2903 = vunpack.c.l.b16 %v2851
      %v2904 = vunpack.c.l.b16 %v2855
      %v2905 = vunpack.c.l.b16 %v2858
      %v2906 = vunpack.c.l.b16 %v2862
      %v2907 = vunpack.c.l.b16 %v2865
      %v2908 = vunpack.c.l.b16 %v2869
      %v2909 = vunpack.c.l.b16 %v2872
      %v2910 = vunpack.c.l.b16 %v2876
      %v2911 = vunpack.c.l.b16 %v2879
      %v2912 = vpack.c.b16 %v2881, %v2880
      %v2913 = vpack.c.b16 %v2883, %v2882
      %v2914 = vpack.c.b16 %v2885, %v2884
      %v2915 = vpack.c.b16 %v2887, %v2886
      %v2916 = vpack.c.b16 %v2889, %v2888
      %v2917 = vpack.c.b16 %v2891, %v2890
      %v2918 = vpack.c.b16 %v2893, %v2892
      %v2919 = vpack.c.b16 %v2895, %v2894
      %v2920 = vpack.c.b16 %v2897, %v2896
      %v2921 = vpack.c.b16 %v2899, %v2898
      %v2922 = vpack.c.b16 %v2901, %v2900
      %v2923 = vpack.c.b16 %v2903, %v2902
      %v2924 = vpack.c.b16 %v2905, %v2904
      %v2925 = vpack.c.b16 %v2907, %v2906
      %v2926 = vpack.c.b16 %v2909, %v2908
      %v2927 = vpack.c.b16 %v2911, %v2910
      %2928 = vrot.lane.b32.xlu0 %v2912, 32
      %v2929 = vpop.permute.xlu0 %2928
      %2930 = vrot.lane.b32.xlu0 %v2913, 32
      %v2931 = vpop.permute.xlu0 %2930
      %2932 = vrot.lane.b32.xlu0 %v2914, 32
      %v2933 = vpop.permute.xlu0 %2932
      %2934 = vrot.lane.b32.xlu0 %v2915, 32
      %v2935 = vpop.permute.xlu0 %2934
      %2936 = vrot.lane.b32.xlu0 %v2916, 32
      %v2937 = vpop.permute.xlu0 %2936
      %2938 = vrot.lane.b32.xlu0 %v2917, 32
      %v2939 = vpop.permute.xlu0 %2938
      %2940 = vrot.lane.b32.xlu0 %v2918, 32
      %v2941 = vpop.permute.xlu0 %2940
      %2942 = vrot.lane.b32.xlu0 %v2919, 32
      %v2943 = vpop.permute.xlu0 %2942
      %2944 = vrot.lane.b32.xlu0 %v2920, 32
      %v2945 = vpop.permute.xlu0 %2944
      %2946 = vrot.lane.b32.xlu0 %v2921, 32
      %v2947 = vpop.permute.xlu0 %2946
      %2948 = vrot.lane.b32.xlu0 %v2922, 32
      %v2949 = vpop.permute.xlu0 %2948
      %2950 = vrot.lane.b32.xlu0 %v2923, 32
      %v2951 = vpop.permute.xlu0 %2950
      %2952 = vrot.lane.b32.xlu0 %v2924, 32
      %v2953 = vpop.permute.xlu0 %2952
      %2954 = vrot.lane.b32.xlu0 %v2925, 32
      %v2955 = vpop.permute.xlu0 %2954
      %2956 = vrot.lane.b32.xlu0 %v2926, 32
      %v2957 = vpop.permute.xlu0 %2956
      %2958 = vrot.lane.b32.xlu0 %v2927, 32
      %v2959 = vpop.permute.xlu0 %2958
      %vm2976 = vcmask 294144
      %2977 = vst.msk [vmem:[#allocation2] sm:$0xff] %vm2976, %v2929
      %2978 = vst.msk [vmem:[#allocation2 + $0x8] sm:$0xff] %vm2976, %v2931
      %2979 = vst.msk [vmem:[#allocation2 + $0x10] sm:$0xff] %vm2976, %v2933
      %2980 = vst.msk [vmem:[#allocation2 + $0x18] sm:$0xff] %vm2976, %v2935
      %2981 = vst.msk [vmem:[#allocation2 + $0x20] sm:$0xff] %vm2976, %v2937
      %2982 = vst.msk [vmem:[#allocation2 + $0x28] sm:$0xff] %vm2976, %v2939
      %2983 = vst.msk [vmem:[#allocation2 + $0x30] sm:$0xff] %vm2976, %v2941
      %2984 = vst.msk [vmem:[#allocation2 + $0x38] sm:$0xff] %vm2976, %v2943
      %2985 = vst.msk [vmem:[#allocation2 + $0x40] sm:$0xff] %vm2976, %v2945
      %2986 = vst.msk [vmem:[#allocation2 + $0x48] sm:$0xff] %vm2976, %v2947
      %2987 = vst.msk [vmem:[#allocation2 + $0x50] sm:$0xff] %vm2976, %v2949
      %2988 = vst.msk [vmem:[#allocation2 + $0x58] sm:$0xff] %vm2976, %v2951
      %2989 = vst.msk [vmem:[#allocation2 + $0x60] sm:$0xff] %vm2976, %v2953
      %2990 = vst.msk [vmem:[#allocation2 + $0x68] sm:$0xff] %vm2976, %v2955
      %2991 = vst.msk [vmem:[#allocation2 + $0x70] sm:$0xff] %vm2976, %v2957
      %2992 = vst.msk [vmem:[#allocation2 + $0x78] sm:$0xff] %vm2976, %v2959
      %v2993 = vld [vmem:[#allocation2] sm:$0xff]
      %v2994 = vld [vmem:[#allocation2 + $0x8] sm:$0xff]
      %v2995 = vld [vmem:[#allocation2 + $0x10] sm:$0xff]
      %v2996 = vld [vmem:[#allocation2 + $0x18] sm:$0xff]
      %v2997 = vld [vmem:[#allocation2 + $0x20] sm:$0xff]
      %v2998 = vld [vmem:[#allocation2 + $0x28] sm:$0xff]
      %v2999 = vld [vmem:[#allocation2 + $0x30] sm:$0xff]
      %v3000 = vld [vmem:[#allocation2 + $0x38] sm:$0xff]
      %v3001 = vld [vmem:[#allocation2 + $0x40] sm:$0xff]
      %v3002 = vld [vmem:[#allocation2 + $0x48] sm:$0xff]
      %v3003 = vld [vmem:[#allocation2 + $0x50] sm:$0xff]
      %v3004 = vld [vmem:[#allocation2 + $0x58] sm:$0xff]
      %v3005 = vld [vmem:[#allocation2 + $0x60] sm:$0xff]
      %v3006 = vld [vmem:[#allocation2 + $0x68] sm:$0xff]
      %v3007 = vld [vmem:[#allocation2 + $0x70] sm:$0xff]
      %v3008 = vld [vmem:[#allocation2 + $0x78] sm:$0xff]
      %v3009 = vld [vmem:[%s1] sm:$0xf]
      %v3010 = vld [vmem:[%s1 + $0x4] sm:$0xf]
      %v3011 = vld [vmem:[%s1 + $0x8] sm:$0xf]
      %v3012 = vld [vmem:[%s1 + $0xc] sm:$0xf]
      %v3013 = vld [vmem:[%s1 + $0x10] sm:$0x3]
      %v3019 = vunpack.c.l.b16 %v3009
      %v3020 = vunpack.c.l.b16 %v3010
      %v3021 = vunpack.c.l.b16 %v3011
      %v3022 = vunpack.c.l.b16 %v3012
      %v3023 = vunpack.c.l.b16 %v3013
      %v3024 = vpack.c.b16 %v3020, %v3019
      %v3025 = vpack.c.b16 %v3022, %v3021
      %v3026 = vpack.c.b16 %v3023, %v3023
      %vm3029 = vcmask 293888
      %v3031 = vsel %vm3029, %v2993, 0
      %v3034 = vsel %vm3029, %v2994, 0
      %v3037 = vsel %vm3029, %v2995, 0
      %v3040 = vsel %vm3029, %v2996, 0
      %v3043 = vsel %vm3029, %v2997, 0
      %v3046 = vsel %vm3029, %v2998, 0
      %v3049 = vsel %vm3029, %v2999, 0
      %v3052 = vsel %vm3029, %v3000, 0
      %v3055 = vsel %vm3029, %v3001, 0
      %v3058 = vsel %vm3029, %v3002, 0
      %v3061 = vsel %vm3029, %v3003, 0
      %v3064 = vsel %vm3029, %v3004, 0
      %v3067 = vsel %vm3029, %v3005, 0
      %v3070 = vsel %vm3029, %v3006, 0
      %v3073 = vsel %vm3029, %v3007, 0
      %v3076 = vsel %vm3029, %v3008, 0
      %vm3078 = vcmask 1041408
      %v3080 = vsel %vm3078, %v3026, 0
      %3082 = vmatprep.subr.bf16.mxu0 0
      %3083 = vmatpush1.bf16.msra.mxu0 %v3024
      %3084 = vmatprep.subr.bf16.mxu0 0
      %3085 = vmatpush1.bf16.msra.mxu0 %v3025
      %3086 = vmatprep.subr.bf16.mxu0 0
      %3087 = vmatpush1.bf16.msra.mxu0 %v3080
      %3088 = vmatprep.subr.bf16.mxu0 0
      %3089 = vmatpush1.bf16.msra.mxu0 0
      %3090 = vmatprep.subr.bf16.mxu0 0
      %3091 = vmatpush1.bf16.msra.mxu0 0
      %3092 = vmatprep.subr.bf16.mxu0 0
      %3093 = vmatpush1.bf16.msra.mxu0 0
      %3094 = vmatprep.subr.bf16.mxu0 0
      %3095 = vmatpush1.bf16.msra.mxu0 0
      %3096 = vmatprep.subr.bf16.mxu0 0
      %3097 = vmatpush1.bf16.msra.mxu0 0
      %3098 = vmatprep.subr.bf16.mxu0 0
      %3099 = vmatpush1.bf16.msra.mxu0 0
      %3100 = vmatprep.subr.bf16.mxu0 0
      %3101 = vmatpush1.bf16.msra.mxu0 0
      %3102 = vmatprep.subr.bf16.mxu0 0
      %3103 = vmatpush1.bf16.msra.mxu0 0
      %3104 = vmatprep.subr.bf16.mxu0 0
      %3105 = vmatpush1.bf16.msra.mxu0 0
      %3106 = vmatprep.subr.bf16.mxu0 0
      %3107 = vmatpush1.bf16.msra.mxu0 0
      %3108 = vmatprep.subr.bf16.mxu0 0
      %3109 = vmatpush1.bf16.msra.mxu0 0
      %3110 = vmatprep.subr.bf16.mxu0 0
      %3111 = vmatpush1.bf16.msra.mxu0 0
      %3112 = vmatprep.subr.bf16.mxu0 0
      %3113 = vmatpush1.bf16.msra.mxu0 0
      %3114 = vmatprep.mubr.bf16.mxu0 0
      %3115 = vmatmul.mubr.bf16.gmra.mrb[0].mxu0 %v3031
      %v3116 = vpop.f32.mrb[0].mxu0
      %v3117 = vadd.f32 0.0, %v3116
      %v3118 = vpop.f32.mrb[0].mxu0
      %v3119 = vpop.f32.mrb[0].mxu0
      %v3120 = vadd.f32 0.0, %v3119
      %v3121 = vpop.f32.mrb[0].mxu0
      %3122 = vmatprep.mubr.bf16.mxu0 0
      %3123 = vmatmul.mubr.bf16.gmra.mrb[0].mxu0 %v3034
      %v3124 = vpop.f32.mrb[0].mxu0
      %v3125 = vadd.f32 0.0, %v3124
      %v3126 = vpop.f32.mrb[0].mxu0
      %v3127 = vpop.f32.mrb[0].mxu0
      %v3128 = vadd.f32 0.0, %v3127
      %v3129 = vpop.f32.mrb[0].mxu0
      %3130 = vmatprep.mubr.bf16.mxu0 0
      %3131 = vmatmul.mubr.bf16.gmra.mrb[0].mxu0 %v3037
      %v3132 = vpop.f32.mrb[0].mxu0
      %v3133 = vadd.f32 0.0, %v3132
      %v3134 = vpop.f32.mrb[0].mxu0
      %v3135 = vpop.f32.mrb[0].mxu0
      %v3136 = vadd.f32 0.0, %v3135
      %v3137 = vpop.f32.mrb[0].mxu0
      %3138 = vmatprep.mubr.bf16.mxu0 0
      %3139 = vmatmul.mubr.bf16.gmra.mrb[0].mxu0 %v3040
      %v3140 = vpop.f32.mrb[0].mxu0
      %v3141 = vadd.f32 0.0, %v3140
      %v3142 = vpop.f32.mrb[0].mxu0
      %v3143 = vpop.f32.mrb[0].mxu0
      %v3144 = vadd.f32 0.0, %v3143
      %v3145 = vpop.f32.mrb[0].mxu0
      %3146 = vmatprep.mubr.bf16.mxu0 0
      %3147 = vmatmul.mubr.bf16.gmra.mrb[0].mxu0 %v3043
      %v3148 = vpop.f32.mrb[0].mxu0
      %v3149 = vadd.f32 0.0, %v3148
      %v3150 = vpop.f32.mrb[0].mxu0
      %v3151 = vpop.f32.mrb[0].mxu0
      %v3152 = vadd.f32 0.0, %v3151
      %v3153 = vpop.f32.mrb[0].mxu0
      %3154 = vmatprep.mubr.bf16.mxu0 0
      %3155 = vmatmul.mubr.bf16.gmra.mrb[0].mxu0 %v3046
      %v3156 = vpop.f32.mrb[0].mxu0
      %v3157 = vadd.f32 0.0, %v3156
      %v3158 = vpop.f32.mrb[0].mxu0
      %v3159 = vpop.f32.mrb[0].mxu0
      %v3160 = vadd.f32 0.0, %v3159
      %v3161 = vpop.f32.mrb[0].mxu0
      %3162 = vmatprep.mubr.bf16.mxu0 0
      %3163 = vmatmul.mubr.bf16.gmra.mrb[0].mxu0 %v3049
      %v3164 = vpop.f32.mrb[0].mxu0
      %v3165 = vadd.f32 0.0, %v3164
      %v3166 = vpop.f32.mrb[0].mxu0
      %v3167 = vpop.f32.mrb[0].mxu0
      %v3168 = vadd.f32 0.0, %v3167
      %v3169 = vpop.f32.mrb[0].mxu0
      %3170 = vmatprep.mubr.bf16.mxu0 0
      %3171 = vmatmul.mubr.bf16.gmra.mrb[0].mxu0 %v3052
      %v3172 = vpop.f32.mrb[0].mxu0
      %v3173 = vadd.f32 0.0, %v3172
      %v3174 = vpop.f32.mrb[0].mxu0
      %v3175 = vpop.f32.mrb[0].mxu0
      %v3176 = vadd.f32 0.0, %v3175
      %v3177 = vpop.f32.mrb[0].mxu0
      %3178 = vmatprep.mubr.bf16.mxu0 0
      %3179 = vmatmul.mubr.bf16.gmra.mrb[0].mxu0 %v3055
      %v3180 = vpop.f32.mrb[0].mxu0
      %v3181 = vadd.f32 0.0, %v3180
      %v3182 = vpop.f32.mrb[0].mxu0
      %v3183 = vpop.f32.mrb[0].mxu0
      %v3184 = vadd.f32 0.0, %v3183
      %v3185 = vpop.f32.mrb[0].mxu0
      %3186 = vmatprep.mubr.bf16.mxu0 0
      %3187 = vmatmul.mubr.bf16.gmra.mrb[0].mxu0 %v3058
      %v3188 = vpop.f32.mrb[0].mxu0
      %v3189 = vadd.f32 0.0, %v3188
      %v3190 = vpop.f32.mrb[0].mxu0
      %v3191 = vpop.f32.mrb[0].mxu0
      %v3192 = vadd.f32 0.0, %v3191
      %v3193 = vpop.f32.mrb[0].mxu0
      %3194 = vmatprep.mubr.bf16.mxu0 0
      %3195 = vmatmul.mubr.bf16.gmra.mrb[0].mxu0 %v3061
      %v3196 = vpop.f32.mrb[0].mxu0
      %v3197 = vadd.f32 0.0, %v3196
      %v3198 = vpop.f32.mrb[0].mxu0
      %v3199 = vpop.f32.mrb[0].mxu0
      %v3200 = vadd.f32 0.0, %v3199
      %v3201 = vpop.f32.mrb[0].mxu0
      %3202 = vmatprep.mubr.bf16.mxu0 0
      %3203 = vmatmul.mubr.bf16.gmra.mrb[0].mxu0 %v3064
      %v3204 = vpop.f32.mrb[0].mxu0
      %v3205 = vadd.f32 0.0, %v3204
      %v3206 = vpop.f32.mrb[0].mxu0
      %v3207 = vpop.f32.mrb[0].mxu0
      %v3208 = vadd.f32 0.0, %v3207
      %v3209 = vpop.f32.mrb[0].mxu0
      %3210 = vmatprep.mubr.bf16.mxu0 0
      %3211 = vmatmul.mubr.bf16.gmra.mrb[0].mxu0 %v3067
      %v3212 = vpop.f32.mrb[0].mxu0
      %v3213 = vadd.f32 0.0, %v3212
      %v3214 = vpop.f32.mrb[0].mxu0
      %v3215 = vpop.f32.mrb[0].mxu0
      %v3216 = vadd.f32 0.0, %v3215
      %v3217 = vpop.f32.mrb[0].mxu0
      %3218 = vmatprep.mubr.bf16.mxu0 0
      %3219 = vmatmul.mubr.bf16.gmra.mrb[0].mxu0 %v3070
      %v3220 = vpop.f32.mrb[0].mxu0
      %v3221 = vadd.f32 0.0, %v3220
      %v3222 = vpop.f32.mrb[0].mxu0
      %v3223 = vpop.f32.mrb[0].mxu0
      %v3224 = vadd.f32 0.0, %v3223
      %v3225 = vpop.f32.mrb[0].mxu0
      %3226 = vmatprep.mubr.bf16.mxu0 0
      %3227 = vmatmul.mubr.bf16.gmra.mrb[0].mxu0 %v3073
      %v3228 = vpop.f32.mrb[0].mxu0
      %v3229 = vadd.f32 0.0, %v3228
      %v3230 = vpop.f32.mrb[0].mxu0
      %v3231 = vpop.f32.mrb[0].mxu0
      %v3232 = vadd.f32 0.0, %v3231
      %v3233 = vpop.f32.mrb[0].mxu0
      %3234 = vmatprep.mubr.bf16.mxu0 0
      %3235 = vmatmul.mubr.bf16.gmra.mrb[0].mxu0 %v3076
      %v3236 = vpop.f32.mrb[0].mxu0
      %v3237 = vadd.f32 0.0, %v3236
      %v3238 = vpop.f32.mrb[0].mxu0
      %v3239 = vpop.f32.mrb[0].mxu0
      %v3240 = vadd.f32 0.0, %v3239
      %v3241 = vpop.f32.mrb[0].mxu0
      %3242 = vdwg.mxu0
      %3243 = vst [vmem:[%s204] sm:$0xff] %v3117
      %3244 = vst [vmem:[%s204 + $0x8] sm:$0xff] %v3120
      %3245 = vst [vmem:[%s204 + $0x10] sm:$0xff] %v3125
      %3246 = vst [vmem:[%s204 + $0x18] sm:$0xff] %v3128
      %3247 = vst [vmem:[%s204 + $0x20] sm:$0xff] %v3133
      %3248 = vst [vmem:[%s204 + $0x28] sm:$0xff] %v3136
      %3249 = vst [vmem:[%s204 + $0x30] sm:$0xff] %v3141
      %3250 = vst [vmem:[%s204 + $0x38] sm:$0xff] %v3144
      %3251 = vst [vmem:[%s204 + $0x40] sm:$0xff] %v3149
      %3252 = vst [vmem:[%s204 + $0x48] sm:$0xff] %v3152
      %3253 = vst [vmem:[%s204 + $0x50] sm:$0xff] %v3157
      %3254 = vst [vmem:[%s204 + $0x58] sm:$0xff] %v3160
      %3255 = vst [vmem:[%s204 + $0x60] sm:$0xff] %v3165
      %3256 = vst [vmem:[%s204 + $0x68] sm:$0xff] %v3168
      %3257 = vst [vmem:[%s204 + $0x70] sm:$0xff] %v3173
      %3258 = vst [vmem:[%s204 + $0x78] sm:$0xff] %v3176
      %3259 = vst [vmem:[%s204 + $0x80] sm:$0xff] %v3181
      %3260 = vst [vmem:[%s204 + $0x88] sm:$0xff] %v3184
      %3261 = vst [vmem:[%s204 + $0x90] sm:$0xff] %v3189
      %3262 = vst [vmem:[%s204 + $0x98] sm:$0xff] %v3192
      %3263 = vst [vmem:[%s204 + $0xa0] sm:$0xff] %v3197
      %3264 = vst [vmem:[%s204 + $0xa8] sm:$0xff] %v3200
      %3265 = vst [vmem:[%s204 + $0xb0] sm:$0xff] %v3205
      %3266 = vst [vmem:[%s204 + $0xb8] sm:$0xff] %v3208
      %3267 = vst [vmem:[%s204 + $0xc0] sm:$0xff] %v3213
      %3268 = vst [vmem:[%s204 + $0xc8] sm:$0xff] %v3216
      %3269 = vst [vmem:[%s204 + $0xd0] sm:$0xff] %v3221
      %3270 = vst [vmem:[%s204 + $0xd8] sm:$0xff] %v3224
      %3271 = vst [vmem:[%s204 + $0xe0] sm:$0xff] %v3229
      %3272 = vst [vmem:[%s204 + $0xe8] sm:$0xff] %v3232
      %3273 = vst [vmem:[%s204 + $0xf0] sm:$0xff] %v3237
      %3274 = vst [vmem:[%s204 + $0xf8] sm:$0xff] %v3240
      %v3275 = vadd.f32 %v3117, %v3120
      %v3276 = vadd.f32 %v3275, %v3125
      %v3277 = vadd.f32 %v3276, %v3128
      %v3278 = vadd.f32 %v3277, %v3133
      %v3279 = vadd.f32 %v3278, %v3136
      %v3280 = vadd.f32 %v3279, %v3141
      %v3281 = vadd.f32 %v3280, %v3144
      %v3282 = vadd.f32 %v3281, %v3149
      %v3283 = vadd.f32 %v3282, %v3152
      %v3284 = vadd.f32 %v3283, %v3157
      %v3285 = vadd.f32 %v3284, %v3160
      %v3286 = vadd.f32 %v3285, %v3165
      %v3287 = vadd.f32 %v3286, %v3168
      %v3288 = vadd.f32 %v3287, %v3173
      %v3289 = vadd.f32 %v3288, %v3176
      %v3290 = vadd.f32 %v3289, %v3181
      %v3291 = vadd.f32 %v3290, %v3184
      %v3292 = vadd.f32 %v3291, %v3189
      %v3293 = vadd.f32 %v3292, %v3192
      %v3294 = vadd.f32 %v3293, %v3197
      %v3295 = vadd.f32 %v3294, %v3200
      %v3296 = vadd.f32 %v3295, %v3205
      %v3297 = vadd.f32 %v3296, %v3208
      %v3298 = vadd.f32 %v3297, %v3213
      %v3299 = vadd.f32 %v3298, %v3216
      %v3300 = vadd.f32 %v3299, %v3221
      %v3301 = vadd.f32 %v3300, %v3224
      %v3302 = vadd.f32 %v3301, %v3229
      %v3303 = vadd.f32 %v3302, %v3232
      %v3304 = vadd.f32 %v3303, %v3237
      %v3305 = vadd.f32 %v3304, %v3240
      %v3306 = vrot.slane %v3305, 4
      %v3307 = vadd.f32 %v3305, %v3306
      %v3308 = vrot.slane %v3307, 2
      %v3309 = vadd.f32 %v3307, %v3308
      %v3310 = vrot.slane %v3309, 1
      %v3311 = vadd.f32 %v3309, %v3310
      %3312 = vst [vmem:[%s212] sm:$0x1] %v3311
      %v3313 = vmul.f32 %v3117, %v3117
      %v3314 = vmul.f32 %v3120, %v3120
      %v3315 = vmul.f32 %v3125, %v3125
      %v3316 = vmul.f32 %v3128, %v3128
      %v3317 = vmul.f32 %v3133, %v3133
      %v3318 = vmul.f32 %v3136, %v3136
      %v3319 = vmul.f32 %v3141, %v3141
      %v3320 = vmul.f32 %v3144, %v3144
      %v3321 = vmul.f32 %v3149, %v3149
      %v3322 = vmul.f32 %v3152, %v3152
      %v3323 = vmul.f32 %v3157, %v3157
      %v3324 = vmul.f32 %v3160, %v3160
      %v3325 = vmul.f32 %v3165, %v3165
      %v3326 = vmul.f32 %v3168, %v3168
      %v3327 = vmul.f32 %v3173, %v3173
      %v3328 = vmul.f32 %v3176, %v3176
      %v3329 = vmul.f32 %v3181, %v3181
      %v3330 = vmul.f32 %v3184, %v3184
      %v3331 = vmul.f32 %v3189, %v3189
      %v3332 = vmul.f32 %v3192, %v3192
      %v3333 = vmul.f32 %v3197, %v3197
      %v3334 = vmul.f32 %v3200, %v3200
      %v3335 = vmul.f32 %v3205, %v3205
      %v3336 = vmul.f32 %v3208, %v3208
      %v3337 = vmul.f32 %v3213, %v3213
      %v3338 = vmul.f32 %v3216, %v3216
      %v3339 = vmul.f32 %v3221, %v3221
      %v3340 = vmul.f32 %v3224, %v3224
      %v3341 = vmul.f32 %v3229, %v3229
      %v3342 = vmul.f32 %v3232, %v3232
      %v3343 = vmul.f32 %v3237, %v3237
      %v3344 = vmul.f32 %v3240, %v3240
      %v3345 = vadd.f32 %v3313, %v3314
      %v3346 = vadd.f32 %v3345, %v3315
      %v3347 = vadd.f32 %v3346, %v3316
      %v3348 = vadd.f32 %v3347, %v3317
      %v3349 = vadd.f32 %v3348, %v3318
      %v3350 = vadd.f32 %v3349, %v3319
      %v3351 = vadd.f32 %v3350, %v3320
      %v3352 = vadd.f32 %v3351, %v3321
      %v3353 = vadd.f32 %v3352, %v3322
      %v3354 = vadd.f32 %v3353, %v3323
      %v3355 = vadd.f32 %v3354, %v3324
      %v3356 = vadd.f32 %v3355, %v3325
      %v3357 = vadd.f32 %v3356, %v3326
      %v3358 = vadd.f32 %v3357, %v3327
      %v3359 = vadd.f32 %v3358, %v3328
      %v3360 = vadd.f32 %v3359, %v3329
      %v3361 = vadd.f32 %v3360, %v3330
      %v3362 = vadd.f32 %v3361, %v3331
      %v3363 = vadd.f32 %v3362, %v3332
      %v3364 = vadd.f32 %v3363, %v3333
      %v3365 = vadd.f32 %v3364, %v3334
      %v3366 = vadd.f32 %v3365, %v3335
      %v3367 = vadd.f32 %v3366, %v3336
      %v3368 = vadd.f32 %v3367, %v3337
      %v3369 = vadd.f32 %v3368, %v3338
      %v3370 = vadd.f32 %v3369, %v3339
      %v3371 = vadd.f32 %v3370, %v3340
      %v3372 = vadd.f32 %v3371, %v3341
      %v3373 = vadd.f32 %v3372, %v3342
      %v3374 = vadd.f32 %v3373, %v3343
      %v3375 = vadd.f32 %v3374, %v3344
      %v3376 = vrot.slane %v3375, 4
      %v3377 = vadd.f32 %v3375, %v3376
      %v3378 = vrot.slane %v3377, 2
      %v3379 = vadd.f32 %v3377, %v3378
      %v3380 = vrot.slane %v3379, 1
      %v3381 = vadd.f32 %v3379, %v3380
      %3382 = vst [vmem:[%s212 + $0x1] sm:$0x1] %v3381
      %s3383 = smul.u32 32, %s20
      %p3384 = scmp.lt.s32.totalorder %s19, 1
      %s3385 = scalar_select %p3384, %s19, 1
      %p3386 = scmp.lt.s32.totalorder %s3383, 31
      %s3387 = scalar_select %p3386, %s3383, 31
      %s3388 = smul.addr %s3385, 32
      %s3389 = sadd.s32 %s3387, %s3388
      %s3390 = smul.addr %s3389, 8
      %s3391 = scalar_lea.vmem %s2, %s3390
      %p3392 = scmp.lt.s32.totalorder %s19, 1
      %s3393 = scalar_select %p3392, %s19, 1
      %p3394 = scmp.lt.s32.totalorder %s20, 0
      %s3395 = scalar_select %p3394, %s20, 0
      %s3396 = sadd.s32 %s3395, %s3393
      %s3397 = smul.addr %s3396, 2
      %s3398 = scalar_lea.vmem %s3, %s3397
      // Predicated region
      $region29: #{conv_transpose_block_forward.1} parent=27 // pred_check
        %p3399 = pneg %p94
      $region30: #{conv_transpose_block_forward.1} parent=27 // pred_check_branch
        %3401 = sbr.rel (%p3399) target = $region32
      $region31: #{conv_transpose_block_forward.1} parent=27 // pred_region
        %s3402 = smul.u32 32, %s20
      $region32: #{conv_transpose_block_forward.1} parent=27 // pred_fallthru
        _
      // Predicated region
      $region33: #{conv_transpose_block_forward.1} parent=27 // pred_check
        %p3403 = pneg %p122
      $region34: #{conv_transpose_block_forward.1} parent=27 // pred_check_branch
        %3405 = sbr.rel (%p3403) target = $region36
      $region35: #{conv_transpose_block_forward.1} parent=27 // pred_region
        _
      $region36: #{conv_transpose_block_forward.1} parent=27 // pred_fallthru
        _
    $region28: #{conv_transpose_block_forward.1} parent=5 // pred_fallthru
      _
    %p3406 = scmp.le.s32.totalorder 2, %s10
    // Predicated region
    $region37: #{conv_transpose_block_forward.1} parent=5 // pred_check
      %p3407 = pneg %p3406
    $region38: #{conv_transpose_block_forward.1} parent=5 // pred_check_branch
      %3409 = sbr.rel (%p3407) target = $region40
    $region39: #{conv_transpose_block_forward.1} parent=5 // pred_region
      %s3410 = ssub.s32 %s10, 2
      // Predicated region
      $region41: #{conv_transpose_block_forward.1} parent=39 // pred_check
        %p3411 = pneg %p100
      $region42: #{conv_transpose_block_forward.1} parent=39 // pred_check_branch
        %3413 = sbr.rel (%p3411) target = $region44
      $region43: #{conv_transpose_block_forward.1} parent=39 // pred_region
        %s3414 = smul.u32 32, %s22
        %p3415 = scmp.lt.s32.totalorder %s21, 1
        %s3416 = scalar_select %p3415, %s21, 1
        %p3417 = scmp.lt.s32.totalorder %s3414, 31
        %s3418 = scalar_select %p3417, %s3414, 31
        %s3419 = smul.addr %s3416, 32
        %s3420 = sadd.s32 %s3418, %s3419
        %s3421 = smul.addr %s3420, 8
        %s3422 = scalar_lea.vmem %s2, %s3421
      $region44: #{conv_transpose_block_forward.1} parent=39 // pred_fallthru
        _
      // Predicated region
      $region45: #{conv_transpose_block_forward.1} parent=39 // pred_check
        %p3423 = pneg %p128
      $region46: #{conv_transpose_block_forward.1} parent=39 // pred_check_branch
        %3425 = sbr.rel (%p3423) target = $region48
      $region47: #{conv_transpose_block_forward.1} parent=39 // pred_region
        %p3426 = scmp.lt.s32.totalorder %s21, 1
        %s3427 = scalar_select %p3426, %s21, 1
        %p3428 = scmp.lt.s32.totalorder %s22, 0
        %s3429 = scalar_select %p3428, %s22, 0
        %s3430 = sadd.s32 %s3429, %s3427
        %s3431 = smul.addr %s3430, 2
        %s3432 = scalar_lea.vmem %s3, %s3431
      $region48: #{conv_transpose_block_forward.1} parent=39 // pred_fallthru
        _
    $region40: #{conv_transpose_block_forward.1} parent=5 // pred_fallthru
      _
  $region6: #{conv_transpose_block_forward.1} parent=0 // loop_footer
    %s14 = sadd.s32 1, %s10
  $region7: #{conv_transpose_block_forward.1} parent=0 // loop_footer_branch
    %9 = sbr.rel target = $region3
  $region8: #{conv_transpose_block_forward.1} parent=0 // loop_exit
    _

</llo_original>
